<compile_context>
chip_gen: v7x
topology: tpu7x:2x2x1
jax: 0.10.0
libtpu: 0.0.40
codegen_flags: <defaults>
</compile_context>

<pallas_src>
import functools

import numpy as np
import jax
import jax.numpy as jnp
from jax.experimental import pallas as pl
from jax.experimental.pallas import tpu as pltpu


# Static hyper-parameters of the PyTorch module.
C_IN, C1, C2 = 12, 240, 3        # channels: input, after layer 1, after layer 2
K1, S1, OP1 = 8, 2, 1            # layer-1 ConvTranspose1d kernel / stride / output_padding
K2, S2, G2 = 32, 16, 3           # layer-2 ConvTranspose1d kernel / stride / groups
CG = C1 // G2                    # 80 input channels per group in layer 2
EPS = 1e-5                       # BatchNorm1d default eps


# ---------------------------------------------------------------------------
# Fused Pallas kernel
# ---------------------------------------------------------------------------
def _decoder_kernel(x_ref, w1_ref, w2_ref, g1_ref, b1_ref, g2_ref, b2_ref, o_ref,
                    *, n_valid, l1, l2):
    f32 = jnp.float32
    n_pad = x_ref.shape[0]

    # ---- Layer 1: ConvTranspose1d(12->240, k=8, s=2, op=1) as one bf16 MXU matmul
    # against the (Cin*Lin, L1*C1) Toeplitz matrix (columns ordered (t, channel)).
    y1 = jnp.dot(x_ref[...], w1_ref[...], preferred_element_type=f32)         # (n_pad, L1*C1)

    # Re-layout to rows=(l, n), lanes=channel: lane-dense for BN1 and a ready-made LHS
    # for the per-group layer-2 matmuls.  Padded batch rows stay exactly zero here.
    y1s = jnp.concatenate([y1[:, t * C1:(t + 1) * C1] for t in range(l1)],
                          axis=0)                                             # (n_pad*L1, C1)

    # ---- BatchNorm1d(240): training-mode biased batch stats over (N, L1), then ReLU.
    # Padded rows are exact zeros, so unmasked sums equal sums over the valid rows.
    cnt1 = float(n_valid * l1)
    s1 = jnp.sum(y1s, axis=0, keepdims=True)                                  # (1, C1)
    ss1 = jnp.sum(y1s * y1s, axis=0, keepdims=True)
    mean1 = s1 / cnt1
    var1 = jnp.maximum(ss1 / cnt1 - mean1 * mean1, 0.0)
    h1 = (y1s - mean1) * jax.lax.rsqrt(var1 + EPS) * g1_ref[...] + b1_ref[...]
    h1 = jnp.maximum(h1, 0.0).astype(jnp.bfloat16)                            # bf16 for MXU

    # Valid-batch row mask for BN2 statistics (padded batch rows of h1 are non-zero after
    # the BN1 affine, but they only ever feed padded output rows which are sliced away).
    rowmask = (jax.lax.broadcasted_iota(jnp.int32, (n_pad, 1), 0) < n_valid).astype(f32)
    cnt2 = float(n_valid * l2)
    zeros_s2 = jnp.zeros((n_pad, S2), f32)

    # ---- Layer 2: grouped ConvTranspose1d(240->3, k=32, s=16, groups=3) + BatchNorm1d(3).
    for g in range(G2):
        lhs = h1[:, g * CG:(g + 1) * CG]                                      # (n_pad*L1, 80)
        rhs = w2_ref[g * CG:(g + 1) * CG, :]                                  # (80, 32) raw weight
        m = jnp.dot(lhs, rhs, preferred_element_type=f32)                     # (n_pad*L1, 32)

        # Overlap-add: output position t = S2*l + k, k in [0, K2).  Split the kernel
        # window into its two stride-S2 halves and lay each out lane-dense over t.
        a, b = m[:, :S2], m[:, S2:]
        a_wide = jnp.concatenate([a[n_pad * t:n_pad * (t + 1), :] for t in range(l1)],
                                 axis=1)                                      # (n_pad, L1*S2)
        b_wide = jnp.concatenate([b[n_pad * t:n_pad * (t + 1), :] for t in range(l1)],
                                 axis=1)                                      # (n_pad, L1*S2)
        yg = (jnp.concatenate([a_wide, zeros_s2], axis=1)
              + jnp.concatenate([zeros_s2, b_wide], axis=1))                  # (n_pad, L2)

        # BatchNorm1d(3): per-output-channel batch stats over the valid batch rows only.
        mg = jnp.sum(yg * rowmask) / cnt2
        vg = jnp.sum(((yg - mg) * rowmask) ** 2) / cnt2
        og = (yg - mg) * jax.lax.rsqrt(vg + EPS) * g2_ref[g] + b2_ref[g]
        o_ref[:, g * l2:(g + 1) * l2] = og


# ---------------------------------------------------------------------------
# Glue: layer-1 Toeplitz matrix, parameter packing, wrapper
# ---------------------------------------------------------------------------
def conv_transpose1d_toeplitz(w, l_in, stride, output_padding):
    """Dense matrix of a (non-grouped) ConvTranspose1d.
    w: (Cin, Cout, K).  Returns ((Cin*Lin, Lout*Cout), Lout); column index = t*Cout + co."""
    w = np.asarray(w, dtype=np.float32)
    c_in, c_out, k = w.shape
    l_out = (l_in - 1) * stride + k + output_padding
    mat = np.zeros((c_in, l_in, l_out, c_out), dtype=np.float32)
    wt = np.transpose(w, (0, 2, 1))                       # (Cin, K, Cout)
    for l in range(l_in):
        mat[:, l, l * stride:l * stride + k, :] = wt
    return mat.reshape(c_in * l_in, l_out * c_out), l_out


def build_decoder_params(w1, w2, gamma1, beta1, gamma2, beta2, l_in):
    w1t, l1 = conv_transpose1d_toeplitz(np.asarray(w1), l_in, S1, OP1)
    l2 = (l1 - 1) * S2 + K2
    assert K2 == 2 * S2, "overlap-add path assumes exactly two stride windows"
    return dict(
        w1t=jnp.asarray(w1t).astype(jnp.bfloat16),                      # (48, L1*240) bf16
        w2g=jnp.asarray(w2).reshape(C1, K2).astype(jnp.bfloat16),       # (240, 32) raw weight
        gamma1=jnp.asarray(gamma1, jnp.float32).reshape(1, C1),         # lane-dense
        beta1=jnp.asarray(beta1, jnp.float32).reshape(1, C1),
        gamma2=jnp.asarray(gamma2, jnp.float32).reshape(C2),            # SMEM scalars
        beta2=jnp.asarray(beta2, jnp.float32).reshape(C2),
        l1=l1, l2=l2,
    )


def decoder_forward(x, params):
    n, c_in, l_in = x.shape
    assert c_in == C_IN
    l1, l2 = params["l1"], params["l2"]
    n_pad = max(8, ((n + 7) // 8) * 8)                    # sublane-align the matmul M dim

    x_mat = x.reshape(n, c_in * l_in)
    x_mat = jnp.pad(x_mat, ((0, n_pad - n), (0, 0))).astype(jnp.bfloat16)

    kern = functools.partial(_decoder_kernel, n_valid=n, l1=l1, l2=l2)
    vmem = pl.BlockSpec(memory_space=pltpu.MemorySpace.VMEM)
    smem = pl.BlockSpec(memory_space=pltpu.MemorySpace.SMEM)

    out = pl.pallas_call(
        kern,
        out_shape=jax.ShapeDtypeStruct((n_pad, G2 * l2), jnp.float32),
        in_specs=[vmem, vmem, vmem, vmem, vmem, smem, smem],
        out_specs=vmem,
    )(x_mat, params["w1t"], params["w2g"], params["gamma1"], params["beta1"],
      params["gamma2"], params["beta2"])

    return out.reshape(n_pad, G2, l2)[:n]


# ---------------------------------------------------------------------------
# Pure-numpy f32 reference of the PyTorch forward (training-mode BatchNorm)
# ---------------------------------------------------------------------------
def _ref_conv_transpose1d(x, w, stride, output_padding, groups):
    x = np.asarray(x, np.float32)
    w = np.asarray(w, np.float32)
    n, c_in, l_in = x.shape
    _, c_og, k = w.shape
    g_in = c_in // groups
    c_out = c_og * groups
    l_out = (l_in - 1) * stride + k + output_padding
    y = np.zeros((n, c_out, l_out), np.float32)
    for ci in range(c_in):
        co0 = (ci // g_in) * c_og
        for j in range(c_og):
            for l in range(l_in):
                y[:, co0 + j, l * stride:l * stride + k] += x[:, ci, l][:, None] * w[ci, j]
    return y


def _ref_batchnorm(x, gamma, beta, eps=EPS):
    mean = x.mean(axis=(0, 2), keepdims=True)
    var = ((x - mean) ** 2).mean(axis=(0, 2), keepdims=True)
    return (x - mean) / np.sqrt(var + eps) * gamma.reshape(1, -1, 1) + beta.reshape(1, -1, 1)


def _ref_decoder(x, w1, w2, g1, b1, g2, b2):
    y1 = _ref_conv_transpose1d(x, w1, S1, OP1, 1)
    h1 = np.maximum(_ref_batchnorm(y1, g1, b1), 0.0)
    y2 = _ref_conv_transpose1d(h1, w2, S2, 0, G2)
    return _ref_batchnorm(y2, g2, b2)


# TODO(synk): BatchNorm running_mean/running_var are not produced/updated; the forward
# uses training-mode batch statistics exactly like the PyTorch module's default forward.

# ---------------------------------------------------------------------------
if __name__ == "__main__":
    key = jax.random.PRNGKey(0)
    k_x, k_w1, k_w2 = jax.random.split(key, 3)

    N, L_IN = 2, 4
    x = jax.random.normal(k_x, (N, C_IN, L_IN), dtype=jnp.float32)

    # Deterministic synthetic params (DCGAN-style small normal init), PyTorch layouts:
    # ConvTranspose1d(12, 240, 8) weight (12, 240, 8); ConvTranspose1d(240, 3, 32, groups=3)
    # weight (240, 1, 32).
    w1 = jax.random.normal(k_w1, (C_IN, C1, K1), dtype=jnp.float32) * 0.02
    w2 = jax.random.normal(k_w2, (C1, C2 // G2, K2), dtype=jnp.float32) * 0.02
    gamma1, beta1 = jnp.ones((C1,), jnp.float32), jnp.zeros((C1,), jnp.float32)
    gamma2, beta2 = jnp.ones((C2,), jnp.float32), jnp.zeros((C2,), jnp.float32)

    params = build_decoder_params(w1, w2, gamma1, beta1, gamma2, beta2, L_IN)
    out = decoder_forward(x, params)
    out = jax.block_until_ready(out)

    # Expected output: L1 = (4-1)*2+8+1 = 15, L2 = (15-1)*16+32 = 256.
    assert out.shape == (N, C2, 256), out.shape
    assert bool(jnp.all(jnp.isfinite(out)))

    # Correctness vs. f32 reference (bf16 MXU operands -> loose tolerance).
    ref = _ref_decoder(np.asarray(x), np.asarray(w1), np.asarray(w2),
                       np.asarray(gamma1), np.asarray(beta1),
                       np.asarray(gamma2), np.asarray(beta2))
    err = float(np.max(np.abs(np.asarray(out, np.float32) - ref)))
    assert err < 0.3, f"max abs error vs reference too large: {err}"

    print("KERNEL_OK")
</pallas_src>

<mosaic_0001>
module attributes {stable_mosaic.version = 11 : i64} {
  func.func @_decoder_kernel(%arg0: memref<8x48xbf16, #tpu.memory_space<vmem>>, %arg1: memref<48x3600xbf16, #tpu.memory_space<vmem>>, %arg2: memref<240x32xbf16, #tpu.memory_space<vmem>>, %arg3: memref<1x240xf32, #tpu.memory_space<vmem>>, %arg4: memref<1x240xf32, #tpu.memory_space<vmem>>, %arg5: memref<3xf32, #tpu.memory_space<smem>>, %arg6: memref<3xf32, #tpu.memory_space<smem>>, %arg7: memref<8x768xf32, #tpu.memory_space<vmem>>) attributes {dimension_semantics = [], scalar_prefetch = 0 : i64, scratch_operands = 0 : i64, tpu.core_type = #tpu.core_type<tc>} {
    %c0 = arith.constant 0 : index
    %c0_0 = arith.constant 0 : index
    %0 = vector.load %arg0[%c0, %c0_0] : memref<8x48xbf16, #tpu.memory_space<vmem>>, vector<8x48xbf16>
    %c0_1 = arith.constant 0 : index
    %c0_2 = arith.constant 0 : index
    %1 = vector.load %arg1[%c0_1, %c0_2] : memref<48x3600xbf16, #tpu.memory_space<vmem>>, vector<48x3600xbf16>
    %cst = arith.constant dense<0.000000e+00> : vector<8x3600xf32>
    %2 = tpu.matmul %0, %1, %cst {dimension_numbers = #tpu.dot_dimension_numbers<[1], [0], [0], [1], [0, 0, 1, 1], [], []>} : vector<8x48xbf16>, vector<48x3600xbf16>, vector<8x3600xf32> -> vector<8x3600xf32>
    %3 = vector.extract_strided_slice %2 {offsets = [0, 0], sizes = [8, 240], strides = [1, 1]} : vector<8x3600xf32> to vector<8x240xf32>
    %4 = vector.extract_strided_slice %2 {offsets = [0, 240], sizes = [8, 240], strides = [1, 1]} : vector<8x3600xf32> to vector<8x240xf32>
    %5 = vector.extract_strided_slice %2 {offsets = [0, 480], sizes = [8, 240], strides = [1, 1]} : vector<8x3600xf32> to vector<8x240xf32>
    %6 = vector.extract_strided_slice %2 {offsets = [0, 720], sizes = [8, 240], strides = [1, 1]} : vector<8x3600xf32> to vector<8x240xf32>
    %7 = vector.extract_strided_slice %2 {offsets = [0, 960], sizes = [8, 240], strides = [1, 1]} : vector<8x3600xf32> to vector<8x240xf32>
    %8 = vector.extract_strided_slice %2 {offsets = [0, 1200], sizes = [8, 240], strides = [1, 1]} : vector<8x3600xf32> to vector<8x240xf32>
    %9 = vector.extract_strided_slice %2 {offsets = [0, 1440], sizes = [8, 240], strides = [1, 1]} : vector<8x3600xf32> to vector<8x240xf32>
    %10 = vector.extract_strided_slice %2 {offsets = [0, 1680], sizes = [8, 240], strides = [1, 1]} : vector<8x3600xf32> to vector<8x240xf32>
    %11 = vector.extract_strided_slice %2 {offsets = [0, 1920], sizes = [8, 240], strides = [1, 1]} : vector<8x3600xf32> to vector<8x240xf32>
    %12 = vector.extract_strided_slice %2 {offsets = [0, 2160], sizes = [8, 240], strides = [1, 1]} : vector<8x3600xf32> to vector<8x240xf32>
    %13 = vector.extract_strided_slice %2 {offsets = [0, 2400], sizes = [8, 240], strides = [1, 1]} : vector<8x3600xf32> to vector<8x240xf32>
    %14 = vector.extract_strided_slice %2 {offsets = [0, 2640], sizes = [8, 240], strides = [1, 1]} : vector<8x3600xf32> to vector<8x240xf32>
    %15 = vector.extract_strided_slice %2 {offsets = [0, 2880], sizes = [8, 240], strides = [1, 1]} : vector<8x3600xf32> to vector<8x240xf32>
    %16 = vector.extract_strided_slice %2 {offsets = [0, 3120], sizes = [8, 240], strides = [1, 1]} : vector<8x3600xf32> to vector<8x240xf32>
    %17 = vector.extract_strided_slice %2 {offsets = [0, 3360], sizes = [8, 240], strides = [1, 1]} : vector<8x3600xf32> to vector<8x240xf32>
    %18 = tpu.concatenate %3, %4, %5, %6, %7, %8, %9, %10, %11, %12, %13, %14, %15, %16, %17 in 0 : vector<8x240xf32>, vector<8x240xf32>, vector<8x240xf32>, vector<8x240xf32>, vector<8x240xf32>, vector<8x240xf32>, vector<8x240xf32>, vector<8x240xf32>, vector<8x240xf32>, vector<8x240xf32>, vector<8x240xf32>, vector<8x240xf32>, vector<8x240xf32>, vector<8x240xf32>, vector<8x240xf32> -> vector<120x240xf32>
    %cst_3 = arith.constant dense<0.000000e+00> : vector<240xf32>
    %19 = vector.multi_reduction <add>, %18, %cst_3 [0] : vector<120x240xf32> to vector<240xf32>
    %20 = vector.shape_cast %19 : vector<240xf32> to vector<1x240xf32>
    %21 = arith.mulf %18, %18 : vector<120x240xf32>
    %cst_4 = arith.constant dense<0.000000e+00> : vector<240xf32>
    %22 = vector.multi_reduction <add>, %21, %cst_4 [0] : vector<120x240xf32> to vector<240xf32>
    %23 = vector.shape_cast %22 : vector<240xf32> to vector<1x240xf32>
    %cst_5 = arith.constant 3.000000e+01 : f32
    %24 = vector.broadcast %cst_5 : f32 to vector<1x240xf32>
    %25 = arith.divf %20, %24 : vector<1x240xf32>
    %cst_6 = arith.constant 3.000000e+01 : f32
    %26 = vector.broadcast %cst_6 : f32 to vector<1x240xf32>
    %27 = arith.divf %23, %26 : vector<1x240xf32>
    %28 = arith.mulf %25, %25 : vector<1x240xf32>
    %29 = arith.subf %27, %28 : vector<1x240xf32>
    %cst_7 = arith.constant 0.000000e+00 : f32
    %30 = vector.broadcast %cst_7 : f32 to vector<1x240xf32>
    %31 = arith.maximumf %29, %30 : vector<1x240xf32>
    %32 = vector.broadcast %25 : vector<1x240xf32> to vector<120x240xf32>
    %33 = arith.subf %18, %32 : vector<120x240xf32>
    %cst_8 = arith.constant 9.99999974E-6 : f32
    %34 = vector.broadcast %cst_8 : f32 to vector<1x240xf32>
    %35 = arith.addf %31, %34 : vector<1x240xf32>
    %36 = math.rsqrt %35 : vector<1x240xf32>
    %37 = vector.broadcast %36 : vector<1x240xf32> to vector<120x240xf32>
    %38 = arith.mulf %33, %37 : vector<120x240xf32>
    %c0_9 = arith.constant 0 : index
    %c0_10 = arith.constant 0 : index
    %39 = vector.load %arg3[%c0_9, %c0_10] : memref<1x240xf32, #tpu.memory_space<vmem>>, vector<1x240xf32>
    %40 = vector.broadcast %39 : vector<1x240xf32> to vector<120x240xf32>
    %41 = arith.mulf %38, %40 : vector<120x240xf32>
    %c0_11 = arith.constant 0 : index
    %c0_12 = arith.constant 0 : index
    %42 = vector.load %arg4[%c0_11, %c0_12] : memref<1x240xf32, #tpu.memory_space<vmem>>, vector<1x240xf32>
    %43 = vector.broadcast %42 : vector<1x240xf32> to vector<120x240xf32>
    %44 = arith.addf %41, %43 : vector<120x240xf32>
    %cst_13 = arith.constant 0.000000e+00 : f32
    %45 = vector.broadcast %cst_13 : f32 to vector<120x240xf32>
    %46 = arith.maximumf %44, %45 : vector<120x240xf32>
    %47 = arith.truncf %46 : vector<120x240xf32> to vector<120x240xbf16>
    %48 = tpu.iota {dimensions = array<i32: 0>} : vector<8x1xi32>
    %c2_i32 = arith.constant 2 : i32
    %49 = vector.broadcast %c2_i32 : i32 to vector<8x1xi32>
    %50 = arith.cmpi slt, %48, %49 : vector<8x1xi32>
    %51 = arith.extui %50 : vector<8x1xi1> to vector<8x1xi32>
    %52 = arith.sitofp %51 : vector<8x1xi32> to vector<8x1xf32>
    %cst_14 = arith.constant 0.000000e+00 : f32
    %53 = vector.broadcast %cst_14 : f32 to vector<8x16xf32>
    %54 = vector.extract_strided_slice %47 {offsets = [0, 0], sizes = [120, 80], strides = [1, 1]} : vector<120x240xbf16> to vector<120x80xbf16>
    %c0_15 = arith.constant 0 : index
    %c0_16 = arith.constant 0 : index
    %55 = vector.load %arg2[%c0_15, %c0_16] : memref<240x32xbf16, #tpu.memory_space<vmem>>, vector<80x32xbf16>
    %cst_17 = arith.constant dense<0.000000e+00> : vector<120x32xf32>
    %56 = tpu.matmul %54, %55, %cst_17 {dimension_numbers = #tpu.dot_dimension_numbers<[1], [0], [0], [1], [0, 0, 1, 1], [], []>} : vector<120x80xbf16>, vector<80x32xbf16>, vector<120x32xf32> -> vector<120x32xf32>
    %57 = vector.extract_strided_slice %56 {offsets = [0, 0], sizes = [120, 16], strides = [1, 1]} : vector<120x32xf32> to vector<120x16xf32>
    %58 = vector.extract_strided_slice %56 {offsets = [0, 16], sizes = [120, 16], strides = [1, 1]} : vector<120x32xf32> to vector<120x16xf32>
    %59 = vector.extract_strided_slice %57 {offsets = [0, 0], sizes = [8, 16], strides = [1, 1]} : vector<120x16xf32> to vector<8x16xf32>
    %60 = vector.extract_strided_slice %57 {offsets = [8, 0], sizes = [8, 16], strides = [1, 1]} : vector<120x16xf32> to vector<8x16xf32>
    %61 = vector.extract_strided_slice %57 {offsets = [16, 0], sizes = [8, 16], strides = [1, 1]} : vector<120x16xf32> to vector<8x16xf32>
    %62 = vector.extract_strided_slice %57 {offsets = [24, 0], sizes = [8, 16], strides = [1, 1]} : vector<120x16xf32> to vector<8x16xf32>
    %63 = vector.extract_strided_slice %57 {offsets = [32, 0], sizes = [8, 16], strides = [1, 1]} : vector<120x16xf32> to vector<8x16xf32>
    %64 = vector.extract_strided_slice %57 {offsets = [40, 0], sizes = [8, 16], strides = [1, 1]} : vector<120x16xf32> to vector<8x16xf32>
    %65 = vector.extract_strided_slice %57 {offsets = [48, 0], sizes = [8, 16], strides = [1, 1]} : vector<120x16xf32> to vector<8x16xf32>
    %66 = vector.extract_strided_slice %57 {offsets = [56, 0], sizes = [8, 16], strides = [1, 1]} : vector<120x16xf32> to vector<8x16xf32>
    %67 = vector.extract_strided_slice %57 {offsets = [64, 0], sizes = [8, 16], strides = [1, 1]} : vector<120x16xf32> to vector<8x16xf32>
    %68 = vector.extract_strided_slice %57 {offsets = [72, 0], sizes = [8, 16], strides = [1, 1]} : vector<120x16xf32> to vector<8x16xf32>
    %69 = vector.extract_strided_slice %57 {offsets = [80, 0], sizes = [8, 16], strides = [1, 1]} : vector<120x16xf32> to vector<8x16xf32>
    %70 = vector.extract_strided_slice %57 {offsets = [88, 0], sizes = [8, 16], strides = [1, 1]} : vector<120x16xf32> to vector<8x16xf32>
    %71 = vector.extract_strided_slice %57 {offsets = [96, 0], sizes = [8, 16], strides = [1, 1]} : vector<120x16xf32> to vector<8x16xf32>
    %72 = vector.extract_strided_slice %57 {offsets = [104, 0], sizes = [8, 16], strides = [1, 1]} : vector<120x16xf32> to vector<8x16xf32>
    %73 = vector.extract_strided_slice %57 {offsets = [112, 0], sizes = [8, 16], strides = [1, 1]} : vector<120x16xf32> to vector<8x16xf32>
    %74 = tpu.concatenate %59, %60, %61, %62, %63, %64, %65, %66, %67, %68, %69, %70, %71, %72, %73 in 1 : vector<8x16xf32>, vector<8x16xf32>, vector<8x16xf32>, vector<8x16xf32>, vector<8x16xf32>, vector<8x16xf32>, vector<8x16xf32>, vector<8x16xf32>, vector<8x16xf32>, vector<8x16xf32>, vector<8x16xf32>, vector<8x16xf32>, vector<8x16xf32>, vector<8x16xf32>, vector<8x16xf32> -> vector<8x240xf32>
    %75 = vector.extract_strided_slice %58 {offsets = [0, 0], sizes = [8, 16], strides = [1, 1]} : vector<120x16xf32> to vector<8x16xf32>
    %76 = vector.extract_strided_slice %58 {offsets = [8, 0], sizes = [8, 16], strides = [1, 1]} : vector<120x16xf32> to vector<8x16xf32>
    %77 = vector.extract_strided_slice %58 {offsets = [16, 0], sizes = [8, 16], strides = [1, 1]} : vector<120x16xf32> to vector<8x16xf32>
    %78 = vector.extract_strided_slice %58 {offsets = [24, 0], sizes = [8, 16], strides = [1, 1]} : vector<120x16xf32> to vector<8x16xf32>
    %79 = vector.extract_strided_slice %58 {offsets = [32, 0], sizes = [8, 16], strides = [1, 1]} : vector<120x16xf32> to vector<8x16xf32>
    %80 = vector.extract_strided_slice %58 {offsets = [40, 0], sizes = [8, 16], strides = [1, 1]} : vector<120x16xf32> to vector<8x16xf32>
    %81 = vector.extract_strided_slice %58 {offsets = [48, 0], sizes = [8, 16], strides = [1, 1]} : vector<120x16xf32> to vector<8x16xf32>
    %82 = vector.extract_strided_slice %58 {offsets = [56, 0], sizes = [8, 16], strides = [1, 1]} : vector<120x16xf32> to vector<8x16xf32>
    %83 = vector.extract_strided_slice %58 {offsets = [64, 0], sizes = [8, 16], strides = [1, 1]} : vector<120x16xf32> to vector<8x16xf32>
    %84 = vector.extract_strided_slice %58 {offsets = [72, 0], sizes = [8, 16], strides = [1, 1]} : vector<120x16xf32> to vector<8x16xf32>
    %85 = vector.extract_strided_slice %58 {offsets = [80, 0], sizes = [8, 16], strides = [1, 1]} : vector<120x16xf32> to vector<8x16xf32>
    %86 = vector.extract_strided_slice %58 {offsets = [88, 0], sizes = [8, 16], strides = [1, 1]} : vector<120x16xf32> to vector<8x16xf32>
    %87 = vector.extract_strided_slice %58 {offsets = [96, 0], sizes = [8, 16], strides = [1, 1]} : vector<120x16xf32> to vector<8x16xf32>
    %88 = vector.extract_strided_slice %58 {offsets = [104, 0], sizes = [8, 16], strides = [1, 1]} : vector<120x16xf32> to vector<8x16xf32>
    %89 = vector.extract_strided_slice %58 {offsets = [112, 0], sizes = [8, 16], strides = [1, 1]} : vector<120x16xf32> to vector<8x16xf32>
    %90 = tpu.concatenate %75, %76, %77, %78, %79, %80, %81, %82, %83, %84, %85, %86, %87, %88, %89 in 1 : vector<8x16xf32>, vector<8x16xf32>, vector<8x16xf32>, vector<8x16xf32>, vector<8x16xf32>, vector<8x16xf32>, vector<8x16xf32>, vector<8x16xf32>, vector<8x16xf32>, vector<8x16xf32>, vector<8x16xf32>, vector<8x16xf32>, vector<8x16xf32>, vector<8x16xf32>, vector<8x16xf32> -> vector<8x240xf32>
    %91 = tpu.concatenate %74, %53 in 1 : vector<8x240xf32>, vector<8x16xf32> -> vector<8x256xf32>
    %92 = tpu.concatenate %53, %90 in 1 : vector<8x16xf32>, vector<8x240xf32> -> vector<8x256xf32>
    %93 = arith.addf %91, %92 : vector<8x256xf32>
    %94 = vector.broadcast %52 : vector<8x1xf32> to vector<8x256xf32>
    %95 = arith.mulf %93, %94 : vector<8x256xf32>
    %96 = vector.shape_cast %95 : vector<8x256xf32> to vector<1x8x256xf32>
    %cst_18 = arith.constant dense<0.000000e+00> : vector<1xf32>
    %97 = vector.multi_reduction <add>, %96, %cst_18 [1, 2] : vector<1x8x256xf32> to vector<1xf32>
    %98 = vector.shape_cast %97 : vector<1xf32> to vector<1x1x1xf32>
    %99 = vector.extract %98[0, 0, 0] : f32 from vector<1x1x1xf32>
    %cst_19 = arith.constant 5.120000e+02 : f32
    %100 = arith.divf %99, %cst_19 : f32
    %101 = vector.broadcast %100 : f32 to vector<8x256xf32>
    %102 = arith.subf %93, %101 : vector<8x256xf32>
    %103 = vector.broadcast %52 : vector<8x1xf32> to vector<8x256xf32>
    %104 = arith.mulf %102, %103 : vector<8x256xf32>
    %105 = arith.mulf %104, %104 : vector<8x256xf32>
    %106 = vector.shape_cast %105 : vector<8x256xf32> to vector<1x8x256xf32>
    %cst_20 = arith.constant dense<0.000000e+00> : vector<1xf32>
    %107 = vector.multi_reduction <add>, %106, %cst_20 [1, 2] : vector<1x8x256xf32> to vector<1xf32>
    %108 = vector.shape_cast %107 : vector<1xf32> to vector<1x1x1xf32>
    %109 = vector.extract %108[0, 0, 0] : f32 from vector<1x1x1xf32>
    %cst_21 = arith.constant 5.120000e+02 : f32
    %110 = arith.divf %109, %cst_21 : f32
    %111 = vector.broadcast %100 : f32 to vector<8x256xf32>
    %112 = arith.subf %93, %111 : vector<8x256xf32>
    %cst_22 = arith.constant 9.99999974E-6 : f32
    %113 = arith.addf %110, %cst_22 : f32
    %114 = math.rsqrt %113 : f32
    %115 = vector.broadcast %114 : f32 to vector<8x256xf32>
    %116 = arith.mulf %112, %115 : vector<8x256xf32>
    %c0_23 = arith.constant 0 : index
    %117 = memref.load %arg5[%c0_23] : memref<3xf32, #tpu.memory_space<smem>>
    %118 = vector.broadcast %117 : f32 to vector<8x256xf32>
    %119 = arith.mulf %116, %118 : vector<8x256xf32>
    %c0_24 = arith.constant 0 : index
    %120 = memref.load %arg6[%c0_24] : memref<3xf32, #tpu.memory_space<smem>>
    %121 = vector.broadcast %120 : f32 to vector<8x256xf32>
    %122 = arith.addf %119, %121 : vector<8x256xf32>
    %c0_25 = arith.constant 0 : index
    %c0_26 = arith.constant 0 : index
    %123 = vector.load %arg7[%c0_25, %c0_26] : memref<8x768xf32, #tpu.memory_space<vmem>>, vector<8x256xf32>
    tpu.vector_store %arg7[%c0_25, %c0_26], %122 {strides = array<i32>} : memref<8x768xf32, #tpu.memory_space<vmem>>, vector<8x256xf32>,
    %124 = vector.extract_strided_slice %47 {offsets = [0, 80], sizes = [120, 80], strides = [1, 1]} : vector<120x240xbf16> to vector<120x80xbf16>
    %c80 = arith.constant 80 : index
    %c0_27 = arith.constant 0 : index
    %125 = vector.load %arg2[%c80, %c0_27] : memref<240x32xbf16, #tpu.memory_space<vmem>>, vector<80x32xbf16>
    %cst_28 = arith.constant dense<0.000000e+00> : vector<120x32xf32>
    %126 = tpu.matmul %124, %125, %cst_28 {dimension_numbers = #tpu.dot_dimension_numbers<[1], [0], [0], [1], [0, 0, 1, 1], [], []>} : vector<120x80xbf16>, vector<80x32xbf16>, vector<120x32xf32> -> vector<120x32xf32>
    %127 = vector.extract_strided_slice %126 {offsets = [0, 0], sizes = [120, 16], strides = [1, 1]} : vector<120x32xf32> to vector<120x16xf32>
    %128 = vector.extract_strided_slice %126 {offsets = [0, 16], sizes = [120, 16], strides = [1, 1]} : vector<120x32xf32> to vector<120x16xf32>
    %129 = vector.extract_strided_slice %127 {offsets = [0, 0], sizes = [8, 16], strides = [1, 1]} : vector<120x16xf32> to vector<8x16xf32>
    %130 = vector.extract_strided_slice %127 {offsets = [8, 0], sizes = [8, 16], strides = [1, 1]} : vector<120x16xf32> to vector<8x16xf32>
    %131 = vector.extract_strided_slice %127 {offsets = [16, 0], sizes = [8, 16], strides = [1, 1]} : vector<120x16xf32> to vector<8x16xf32>
    %132 = vector.extract_strided_slice %127 {offsets = [24, 0], sizes = [8, 16], strides = [1, 1]} : vector<120x16xf32> to vector<8x16xf32>
    %133 = vector.extract_strided_slice %127 {offsets = [32, 0], sizes = [8, 16], strides = [1, 1]} : vector<120x16xf32> to vector<8x16xf32>
    %134 = vector.extract_strided_slice %127 {offsets = [40, 0], sizes = [8, 16], strides = [1, 1]} : vector<120x16xf32> to vector<8x16xf32>
    %135 = vector.extract_strided_slice %127 {offsets = [48, 0], sizes = [8, 16], strides = [1, 1]} : vector<120x16xf32> to vector<8x16xf32>
    %136 = vector.extract_strided_slice %127 {offsets = [56, 0], sizes = [8, 16], strides = [1, 1]} : vector<120x16xf32> to vector<8x16xf32>
    %137 = vector.extract_strided_slice %127 {offsets = [64, 0], sizes = [8, 16], strides = [1, 1]} : vector<120x16xf32> to vector<8x16xf32>
    %138 = vector.extract_strided_slice %127 {offsets = [72, 0], sizes = [8, 16], strides = [1, 1]} : vector<120x16xf32> to vector<8x16xf32>
    %139 = vector.extract_strided_slice %127 {offsets = [80, 0], sizes = [8, 16], strides = [1, 1]} : vector<120x16xf32> to vector<8x16xf32>
    %140 = vector.extract_strided_slice %127 {offsets = [88, 0], sizes = [8, 16], strides = [1, 1]} : vector<120x16xf32> to vector<8x16xf32>
    %141 = vector.extract_strided_slice %127 {offsets = [96, 0], sizes = [8, 16], strides = [1, 1]} : vector<120x16xf32> to vector<8x16xf32>
    %142 = vector.extract_strided_slice %127 {offsets = [104, 0], sizes = [8, 16], strides = [1, 1]} : vector<120x16xf32> to vector<8x16xf32>
    %143 = vector.extract_strided_slice %127 {offsets = [112, 0], sizes = [8, 16], strides = [1, 1]} : vector<120x16xf32> to vector<8x16xf32>
    %144 = tpu.concatenate %129, %130, %131, %132, %133, %134, %135, %136, %137, %138, %139, %140, %141, %142, %143 in 1 : vector<8x16xf32>, vector<8x16xf32>, vector<8x16xf32>, vector<8x16xf32>, vector<8x16xf32>, vector<8x16xf32>, vector<8x16xf32>, vector<8x16xf32>, vector<8x16xf32>, vector<8x16xf32>, vector<8x16xf32>, vector<8x16xf32>, vector<8x16xf32>, vector<8x16xf32>, vector<8x16xf32> -> vector<8x240xf32>
    %145 = vector.extract_strided_slice %128 {offsets = [0, 0], sizes = [8, 16], strides = [1, 1]} : vector<120x16xf32> to vector<8x16xf32>
    %146 = vector.extract_strided_slice %128 {offsets = [8, 0], sizes = [8, 16], strides = [1, 1]} : vector<120x16xf32> to vector<8x16xf32>
    %147 = vector.extract_strided_slice %128 {offsets = [16, 0], sizes = [8, 16], strides = [1, 1]} : vector<120x16xf32> to vector<8x16xf32>
    %148 = vector.extract_strided_slice %128 {offsets = [24, 0], sizes = [8, 16], strides = [1, 1]} : vector<120x16xf32> to vector<8x16xf32>
    %149 = vector.extract_strided_slice %128 {offsets = [32, 0], sizes = [8, 16], strides = [1, 1]} : vector<120x16xf32> to vector<8x16xf32>
    %150 = vector.extract_strided_slice %128 {offsets = [40, 0], sizes = [8, 16], strides = [1, 1]} : vector<120x16xf32> to vector<8x16xf32>
    %151 = vector.extract_strided_slice %128 {offsets = [48, 0], sizes = [8, 16], strides = [1, 1]} : vector<120x16xf32> to vector<8x16xf32>
    %152 = vector.extract_strided_slice %128 {offsets = [56, 0], sizes = [8, 16], strides = [1, 1]} : vector<120x16xf32> to vector<8x16xf32>
    %153 = vector.extract_strided_slice %128 {offsets = [64, 0], sizes = [8, 16], strides = [1, 1]} : vector<120x16xf32> to vector<8x16xf32>
    %154 = vector.extract_strided_slice %128 {offsets = [72, 0], sizes = [8, 16], strides = [1, 1]} : vector<120x16xf32> to vector<8x16xf32>
    %155 = vector.extract_strided_slice %128 {offsets = [80, 0], sizes = [8, 16], strides = [1, 1]} : vector<120x16xf32> to vector<8x16xf32>
    %156 = vector.extract_strided_slice %128 {offsets = [88, 0], sizes = [8, 16], strides = [1, 1]} : vector<120x16xf32> to vector<8x16xf32>
    %157 = vector.extract_strided_slice %128 {offsets = [96, 0], sizes = [8, 16], strides = [1, 1]} : vector<120x16xf32> to vector<8x16xf32>
    %158 = vector.extract_strided_slice %128 {offsets = [104, 0], sizes = [8, 16], strides = [1, 1]} : vector<120x16xf32> to vector<8x16xf32>
    %159 = vector.extract_strided_slice %128 {offsets = [112, 0], sizes = [8, 16], strides = [1, 1]} : vector<120x16xf32> to vector<8x16xf32>
    %160 = tpu.concatenate %145, %146, %147, %148, %149, %150, %151, %152, %153, %154, %155, %156, %157, %158, %159 in 1 : vector<8x16xf32>, vector<8x16xf32>, vector<8x16xf32>, vector<8x16xf32>, vector<8x16xf32>, vector<8x16xf32>, vector<8x16xf32>, vector<8x16xf32>, vector<8x16xf32>, vector<8x16xf32>, vector<8x16xf32>, vector<8x16xf32>, vector<8x16xf32>, vector<8x16xf32>, vector<8x16xf32> -> vector<8x240xf32>
    %161 = tpu.concatenate %144, %53 in 1 : vector<8x240xf32>, vector<8x16xf32> -> vector<8x256xf32>
    %162 = tpu.concatenate %53, %160 in 1 : vector<8x16xf32>, vector<8x240xf32> -> vector<8x256xf32>
    %163 = arith.addf %161, %162 : vector<8x256xf32>
    %164 = vector.broadcast %52 : vector<8x1xf32> to vector<8x256xf32>
    %165 = arith.mulf %163, %164 : vector<8x256xf32>
    %166 = vector.shape_cast %165 : vector<8x256xf32> to vector<1x8x256xf32>
    %cst_29 = arith.constant dense<0.000000e+00> : vector<1xf32>
    %167 = vector.multi_reduction <add>, %166, %cst_29 [1, 2] : vector<1x8x256xf32> to vector<1xf32>
    %168 = vector.shape_cast %167 : vector<1xf32> to vector<1x1x1xf32>
    %169 = vector.extract %168[0, 0, 0] : f32 from vector<1x1x1xf32>
    %cst_30 = arith.constant 5.120000e+02 : f32
    %170 = arith.divf %169, %cst_30 : f32
    %171 = vector.broadcast %170 : f32 to vector<8x256xf32>
    %172 = arith.subf %163, %171 : vector<8x256xf32>
    %173 = vector.broadcast %52 : vector<8x1xf32> to vector<8x256xf32>
    %174 = arith.mulf %172, %173 : vector<8x256xf32>
    %175 = arith.mulf %174, %174 : vector<8x256xf32>
    %176 = vector.shape_cast %175 : vector<8x256xf32> to vector<1x8x256xf32>
    %cst_31 = arith.constant dense<0.000000e+00> : vector<1xf32>
    %177 = vector.multi_reduction <add>, %176, %cst_31 [1, 2] : vector<1x8x256xf32> to vector<1xf32>
    %178 = vector.shape_cast %177 : vector<1xf32> to vector<1x1x1xf32>
    %179 = vector.extract %178[0, 0, 0] : f32 from vector<1x1x1xf32>
    %cst_32 = arith.constant 5.120000e+02 : f32
    %180 = arith.divf %179, %cst_32 : f32
    %181 = vector.broadcast %170 : f32 to vector<8x256xf32>
    %182 = arith.subf %163, %181 : vector<8x256xf32>
    %cst_33 = arith.constant 9.99999974E-6 : f32
    %183 = arith.addf %180, %cst_33 : f32
    %184 = math.rsqrt %183 : f32
    %185 = vector.broadcast %184 : f32 to vector<8x256xf32>
    %186 = arith.mulf %182, %185 : vector<8x256xf32>
    %c1 = arith.constant 1 : index
    %187 = memref.load %arg5[%c1] : memref<3xf32, #tpu.memory_space<smem>>
    %188 = vector.broadcast %187 : f32 to vector<8x256xf32>
    %189 = arith.mulf %186, %188 : vector<8x256xf32>
    %c1_34 = arith.constant 1 : index
    %190 = memref.load %arg6[%c1_34] : memref<3xf32, #tpu.memory_space<smem>>
    %191 = vector.broadcast %190 : f32 to vector<8x256xf32>
    %192 = arith.addf %189, %191 : vector<8x256xf32>
    %c0_35 = arith.constant 0 : index
    %c256 = arith.constant 256 : index
    %193 = vector.load %arg7[%c0_35, %c256] : memref<8x768xf32, #tpu.memory_space<vmem>>, vector<8x256xf32>
    tpu.vector_store %arg7[%c0_35, %c256], %192 {strides = array<i32>} : memref<8x768xf32, #tpu.memory_space<vmem>>, vector<8x256xf32>,
    %194 = vector.extract_strided_slice %47 {offsets = [0, 160], sizes = [120, 80], strides = [1, 1]} : vector<120x240xbf16> to vector<120x80xbf16>
    %c160 = arith.constant 160 : index
    %c0_36 = arith.constant 0 : index
    %195 = vector.load %arg2[%c160, %c0_36] : memref<240x32xbf16, #tpu.memory_space<vmem>>, vector<80x32xbf16>
    %cst_37 = arith.constant dense<0.000000e+00> : vector<120x32xf32>
    %196 = tpu.matmul %194, %195, %cst_37 {dimension_numbers = #tpu.dot_dimension_numbers<[1], [0], [0], [1], [0, 0, 1, 1], [], []>} : vector<120x80xbf16>, vector<80x32xbf16>, vector<120x32xf32> -> vector<120x32xf32>
    %197 = vector.extract_strided_slice %196 {offsets = [0, 0], sizes = [120, 16], strides = [1, 1]} : vector<120x32xf32> to vector<120x16xf32>
    %198 = vector.extract_strided_slice %196 {offsets = [0, 16], sizes = [120, 16], strides = [1, 1]} : vector<120x32xf32> to vector<120x16xf32>
    %199 = vector.extract_strided_slice %197 {offsets = [0, 0], sizes = [8, 16], strides = [1, 1]} : vector<120x16xf32> to vector<8x16xf32>
    %200 = vector.extract_strided_slice %197 {offsets = [8, 0], sizes = [8, 16], strides = [1, 1]} : vector<120x16xf32> to vector<8x16xf32>
    %201 = vector.extract_strided_slice %197 {offsets = [16, 0], sizes = [8, 16], strides = [1, 1]} : vector<120x16xf32> to vector<8x16xf32>
    %202 = vector.extract_strided_slice %197 {offsets = [24, 0], sizes = [8, 16], strides = [1, 1]} : vector<120x16xf32> to vector<8x16xf32>
    %203 = vector.extract_strided_slice %197 {offsets = [32, 0], sizes = [8, 16], strides = [1, 1]} : vector<120x16xf32> to vector<8x16xf32>
    %204 = vector.extract_strided_slice %197 {offsets = [40, 0], sizes = [8, 16], strides = [1, 1]} : vector<120x16xf32> to vector<8x16xf32>
    %205 = vector.extract_strided_slice %197 {offsets = [48, 0], sizes = [8, 16], strides = [1, 1]} : vector<120x16xf32> to vector<8x16xf32>
    %206 = vector.extract_strided_slice %197 {offsets = [56, 0], sizes = [8, 16], strides = [1, 1]} : vector<120x16xf32> to vector<8x16xf32>
    %207 = vector.extract_strided_slice %197 {offsets = [64, 0], sizes = [8, 16], strides = [1, 1]} : vector<120x16xf32> to vector<8x16xf32>
    %208 = vector.extract_strided_slice %197 {offsets = [72, 0], sizes = [8, 16], strides = [1, 1]} : vector<120x16xf32> to vector<8x16xf32>
    %209 = vector.extract_strided_slice %197 {offsets = [80, 0], sizes = [8, 16], strides = [1, 1]} : vector<120x16xf32> to vector<8x16xf32>
    %210 = vector.extract_strided_slice %197 {offsets = [88, 0], sizes = [8, 16], strides = [1, 1]} : vector<120x16xf32> to vector<8x16xf32>
    %211 = vector.extract_strided_slice %197 {offsets = [96, 0], sizes = [8, 16], strides = [1, 1]} : vector<120x16xf32> to vector<8x16xf32>
    %212 = vector.extract_strided_slice %197 {offsets = [104, 0], sizes = [8, 16], strides = [1, 1]} : vector<120x16xf32> to vector<8x16xf32>
    %213 = vector.extract_strided_slice %197 {offsets = [112, 0], sizes = [8, 16], strides = [1, 1]} : vector<120x16xf32> to vector<8x16xf32>
    %214 = tpu.concatenate %199, %200, %201, %202, %203, %204, %205, %206, %207, %208, %209, %210, %211, %212, %213 in 1 : vector<8x16xf32>, vector<8x16xf32>, vector<8x16xf32>, vector<8x16xf32>, vector<8x16xf32>, vector<8x16xf32>, vector<8x16xf32>, vector<8x16xf32>, vector<8x16xf32>, vector<8x16xf32>, vector<8x16xf32>, vector<8x16xf32>, vector<8x16xf32>, vector<8x16xf32>, vector<8x16xf32> -> vector<8x240xf32>
    %215 = vector.extract_strided_slice %198 {offsets = [0, 0], sizes = [8, 16], strides = [1, 1]} : vector<120x16xf32> to vector<8x16xf32>
    %216 = vector.extract_strided_slice %198 {offsets = [8, 0], sizes = [8, 16], strides = [1, 1]} : vector<120x16xf32> to vector<8x16xf32>
    %217 = vector.extract_strided_slice %198 {offsets = [16, 0], sizes = [8, 16], strides = [1, 1]} : vector<120x16xf32> to vector<8x16xf32>
    %218 = vector.extract_strided_slice %198 {offsets = [24, 0], sizes = [8, 16], strides = [1, 1]} : vector<120x16xf32> to vector<8x16xf32>
    %219 = vector.extract_strided_slice %198 {offsets = [32, 0], sizes = [8, 16], strides = [1, 1]} : vector<120x16xf32> to vector<8x16xf32>
    %220 = vector.extract_strided_slice %198 {offsets = [40, 0], sizes = [8, 16], strides = [1, 1]} : vector<120x16xf32> to vector<8x16xf32>
    %221 = vector.extract_strided_slice %198 {offsets = [48, 0], sizes = [8, 16], strides = [1, 1]} : vector<120x16xf32> to vector<8x16xf32>
    %222 = vector.extract_strided_slice %198 {offsets = [56, 0], sizes = [8, 16], strides = [1, 1]} : vector<120x16xf32> to vector<8x16xf32>
    %223 = vector.extract_strided_slice %198 {offsets = [64, 0], sizes = [8, 16], strides = [1, 1]} : vector<120x16xf32> to vector<8x16xf32>
    %224 = vector.extract_strided_slice %198 {offsets = [72, 0], sizes = [8, 16], strides = [1, 1]} : vector<120x16xf32> to vector<8x16xf32>
    %225 = vector.extract_strided_slice %198 {offsets = [80, 0], sizes = [8, 16], strides = [1, 1]} : vector<120x16xf32> to vector<8x16xf32>
    %226 = vector.extract_strided_slice %198 {offsets = [88, 0], sizes = [8, 16], strides = [1, 1]} : vector<120x16xf32> to vector<8x16xf32>
    %227 = vector.extract_strided_slice %198 {offsets = [96, 0], sizes = [8, 16], strides = [1, 1]} : vector<120x16xf32> to vector<8x16xf32>
    %228 = vector.extract_strided_slice %198 {offsets = [104, 0], sizes = [8, 16], strides = [1, 1]} : vector<120x16xf32> to vector<8x16xf32>
    %229 = vector.extract_strided_slice %198 {offsets = [112, 0], sizes = [8, 16], strides = [1, 1]} : vector<120x16xf32> to vector<8x16xf32>
    %230 = tpu.concatenate %215, %216, %217, %218, %219, %220, %221, %222, %223, %224, %225, %226, %227, %228, %229 in 1 : vector<8x16xf32>, vector<8x16xf32>, vector<8x16xf32>, vector<8x16xf32>, vector<8x16xf32>, vector<8x16xf32>, vector<8x16xf32>, vector<8x16xf32>, vector<8x16xf32>, vector<8x16xf32>, vector<8x16xf32>, vector<8x16xf32>, vector<8x16xf32>, vector<8x16xf32>, vector<8x16xf32> -> vector<8x240xf32>
    %231 = tpu.concatenate %214, %53 in 1 : vector<8x240xf32>, vector<8x16xf32> -> vector<8x256xf32>
    %232 = tpu.concatenate %53, %230 in 1 : vector<8x16xf32>, vector<8x240xf32> -> vector<8x256xf32>
    %233 = arith.addf %231, %232 : vector<8x256xf32>
    %234 = vector.broadcast %52 : vector<8x1xf32> to vector<8x256xf32>
    %235 = arith.mulf %233, %234 : vector<8x256xf32>
    %236 = vector.shape_cast %235 : vector<8x256xf32> to vector<1x8x256xf32>
    %cst_38 = arith.constant dense<0.000000e+00> : vector<1xf32>
    %237 = vector.multi_reduction <add>, %236, %cst_38 [1, 2] : vector<1x8x256xf32> to vector<1xf32>
    %238 = vector.shape_cast %237 : vector<1xf32> to vector<1x1x1xf32>
    %239 = vector.extract %238[0, 0, 0] : f32 from vector<1x1x1xf32>
    %cst_39 = arith.constant 5.120000e+02 : f32
    %240 = arith.divf %239, %cst_39 : f32
    %241 = vector.broadcast %240 : f32 to vector<8x256xf32>
    %242 = arith.subf %233, %241 : vector<8x256xf32>
    %243 = vector.broadcast %52 : vector<8x1xf32> to vector<8x256xf32>
    %244 = arith.mulf %242, %243 : vector<8x256xf32>
    %245 = arith.mulf %244, %244 : vector<8x256xf32>
    %246 = vector.shape_cast %245 : vector<8x256xf32> to vector<1x8x256xf32>
    %cst_40 = arith.constant dense<0.000000e+00> : vector<1xf32>
    %247 = vector.multi_reduction <add>, %246, %cst_40 [1, 2] : vector<1x8x256xf32> to vector<1xf32>
    %248 = vector.shape_cast %247 : vector<1xf32> to vector<1x1x1xf32>
    %249 = vector.extract %248[0, 0, 0] : f32 from vector<1x1x1xf32>
    %cst_41 = arith.constant 5.120000e+02 : f32
    %250 = arith.divf %249, %cst_41 : f32
    %251 = vector.broadcast %240 : f32 to vector<8x256xf32>
    %252 = arith.subf %233, %251 : vector<8x256xf32>
    %cst_42 = arith.constant 9.99999974E-6 : f32
    %253 = arith.addf %250, %cst_42 : f32
    %254 = math.rsqrt %253 : f32
    %255 = vector.broadcast %254 : f32 to vector<8x256xf32>
    %256 = arith.mulf %252, %255 : vector<8x256xf32>
    %c2 = arith.constant 2 : index
    %257 = memref.load %arg5[%c2] : memref<3xf32, #tpu.memory_space<smem>>
    %258 = vector.broadcast %257 : f32 to vector<8x256xf32>
    %259 = arith.mulf %256, %258 : vector<8x256xf32>
    %c2_43 = arith.constant 2 : index
    %260 = memref.load %arg6[%c2_43] : memref<3xf32, #tpu.memory_space<smem>>
    %261 = vector.broadcast %260 : f32 to vector<8x256xf32>
    %262 = arith.addf %259, %261 : vector<8x256xf32>
    %c0_44 = arith.constant 0 : index
    %c512 = arith.constant 512 : index
    %263 = vector.load %arg7[%c0_44, %c512] : memref<8x768xf32, #tpu.memory_space<vmem>>, vector<8x256xf32>
    tpu.vector_store %arg7[%c0_44, %c512], %262 {strides = array<i32>} : memref<8x768xf32, #tpu.memory_space<vmem>>, vector<8x256xf32>,
    return
  }
}

</mosaic_0001>

<llo_original>
// kernel: tpu_custom_call.1
$region0: #{tpu_custom_call.1}
  #allocation0 [shape = 'u32[]', space=smem, size = 0x4, offset = 0x4, fixed_abs, tag = 'smem constant byte address 0x4 - core index']
  #allocation1 [shape = 'u32[144,128]{1,0:T(1,128)}', space=vmem, size = 0x12000, scoped, tag = 'internal scratch']
  %s0 = inlined_call_operand.vmem [shape: bf16[8,48], index: 0, kind: input, shape index: {}]
  %s1 = inlined_call_operand.hbm [shape: bf16[48,3600], index: 1, kind: input, shape index: {}]
  %s2 = inlined_call_operand.vmem [shape: bf16[240,32], index: 2, kind: input, shape index: {}]
  %s3 = inlined_call_operand.vmem [shape: f32[1,240], index: 3, kind: input, shape index: {}]
  %s4 = inlined_call_operand.vmem [shape: f32[1,240], index: 4, kind: input, shape index: {}]
  %s5 = inlined_call_operand.vmem [shape: f32[3], index: 5, kind: input, shape index: {}]
  %s6 = inlined_call_operand.vmem [shape: f32[3], index: 6, kind: input, shape index: {}]
  %s7 = inlined_call_operand.hbm [shape: f32[8,768], index: 7, kind: output, shape index: {}]
  %s8 = sld [smem:[#allocation0]]
  $region50: #{tpu_custom_call.1} parent=0
    _
  %s10 = ssub.s32 1, %s8
  %s11 = scalar_select 0, %s10, %s8
  $region1: #{tpu_custom_call.1} parent=0
    #allocation2 [shape = 'u8[356352]{0}', space=vmem, size = 0x57000, scoped, tag = 'input window, operand 1, single buffered']
    #allocation3 [shape = 's32[1]{0}', space=sflag, size = 0x4, scoped, tag = 'scoped memory for tpu_custom_call.1']
    #allocation4 [shape = 's32[1]{0}', space=sflag, size = 0x4, scoped, tag = 'scoped memory for tpu_custom_call.1']
    #allocation5 [shape = 's32[1]{0}', space=sflag, size = 0x4, scoped, tag = 'scoped memory for tpu_custom_call.1']
    #allocation6 [shape = 'u8[512]{0}', space=smem, size = 0x200, scoped, tag = 'input window, operand 5, single buffered']
    #allocation7 [shape = 'u8[512]{0}', space=smem, size = 0x200, scoped, tag = 'input window, operand 6, single buffered']
    #allocation8 [shape = 's32[1]{0}', space=sflag, size = 0x4, scoped, tag = 'scoped memory for tpu_custom_call.1']
    #allocation9 [shape = 'u8[24576]{0}', space=vmem, size = 0x6000, scoped, tag = 'output window, operand 0, single buffered']
    %12 = vsyncpa [#allocation3], 0
    %13 = vsyncpa [#allocation5], 0
    %14 = vsyncpa [#allocation8], 0
    %15 = vsyncpa [#allocation4], 0
    // Predicated region
    $region2: #{tpu_custom_call.1} parent=1 // pred_check
      _
    $region3: #{tpu_custom_call.1} parent=1 // pred_check_branch
      %17 = sbr.rel (0) target = $region5
    $region4: #{tpu_custom_call.1} parent=1 // pred_region
      _
    $region5: #{tpu_custom_call.1} parent=1 // pred_fallthru
      _
    // Predicated region
    $region6: #{tpu_custom_call.1} parent=1 // pred_check
      _
    $region7: #{tpu_custom_call.1} parent=1 // pred_check_branch
      %19 = sbr.rel (0) target = $region9
    $region8: #{tpu_custom_call.1} parent=1 // pred_region
      %s21 = ssub.s32 11136, 11136
      %22 = vsyncadd [#allocation3], %s21
      %s23 = sshll.u32 [#allocation2], 4
      %s24 = int_to_ptr.vmem [resolvable:$true] %s23
      %29 = dma.hbm_to_vmem [thread:$0]  %s1, 11136, %s24, [#allocation3], 1856, 1856, 116
    $region9: #{tpu_custom_call.1} parent=1 // pred_fallthru
      _
    // Predicated region
    $region10: #{tpu_custom_call.1} parent=1 // pred_check
      _
    $region11: #{tpu_custom_call.1} parent=1 // pred_check_branch
      %31 = sbr.rel (0) target = $region13
    $region12: #{tpu_custom_call.1} parent=1 // pred_region
      _
    $region13: #{tpu_custom_call.1} parent=1 // pred_fallthru
      _
    // Predicated region
    $region14: #{tpu_custom_call.1} parent=1 // pred_check
      _
    $region15: #{tpu_custom_call.1} parent=1 // pred_check_branch
      %33 = sbr.rel (0) target = $region17
    $region16: #{tpu_custom_call.1} parent=1 // pred_region
      _
    $region17: #{tpu_custom_call.1} parent=1 // pred_fallthru
      _
    // Predicated region
    $region18: #{tpu_custom_call.1} parent=1 // pred_check
      _
    $region19: #{tpu_custom_call.1} parent=1 // pred_check_branch
      %35 = sbr.rel (0) target = $region21
    $region20: #{tpu_custom_call.1} parent=1 // pred_region
      _
    $region21: #{tpu_custom_call.1} parent=1 // pred_fallthru
      _
    // Predicated region
    $region22: #{tpu_custom_call.1} parent=1 // pred_check
      _
    $region23: #{tpu_custom_call.1} parent=1 // pred_check_branch
      %37 = sbr.rel (0) target = $region25
    $region24: #{tpu_custom_call.1} parent=1 // pred_region
      %s39 = ssub.s32 16, 16
      %40 = vsyncadd [#allocation5], %s39
      %s42 = sshll.u32 %s5, 4
      %s43 = int_to_ptr.vmem [resolvable:$true] %s42
      %45 = dma.vmem_to_smem %s43, 16, [#allocation6], [#allocation5]
    $region25: #{tpu_custom_call.1} parent=1 // pred_fallthru
      _
    // Predicated region
    $region26: #{tpu_custom_call.1} parent=1 // pred_check
      _
    $region27: #{tpu_custom_call.1} parent=1 // pred_check_branch
      %47 = sbr.rel (0) target = $region29
    $region28: #{tpu_custom_call.1} parent=1 // pred_region
      %s49 = ssub.s32 16, 16
      %50 = vsyncadd [#allocation8], %s49
      %s52 = sshll.u32 %s6, 4
      %s53 = int_to_ptr.vmem [resolvable:$true] %s52
      %55 = dma.vmem_to_smem %s53, 16, [#allocation7], [#allocation8]
    $region29: #{tpu_custom_call.1} parent=1 // pred_fallthru
      _
    // Predicated region
    $region30: #{tpu_custom_call.1} parent=1 // pred_check
      _
    $region31: #{tpu_custom_call.1} parent=1 // pred_check_branch
      %57 = sbr.rel (0) target = $region33
    $region32: #{tpu_custom_call.1} parent=1 // pred_region
      %58 = dma.done [#allocation3], 11136
    $region33: #{tpu_custom_call.1} parent=1 // pred_fallthru
      _
    // Predicated region
    $region34: #{tpu_custom_call.1} parent=1 // pred_check
      _
    $region35: #{tpu_custom_call.1} parent=1 // pred_check_branch
      %60 = sbr.rel (0) target = $region37
    $region36: #{tpu_custom_call.1} parent=1 // pred_region
      %61 = dma.done [#allocation5], 16
    $region37: #{tpu_custom_call.1} parent=1 // pred_fallthru
      _
    // Predicated region
    $region38: #{tpu_custom_call.1} parent=1 // pred_check
      _
    $region39: #{tpu_custom_call.1} parent=1 // pred_check_branch
      %63 = sbr.rel (0) target = $region41
    $region40: #{tpu_custom_call.1} parent=1 // pred_region
      %64 = dma.done [#allocation8], 16
    $region41: #{tpu_custom_call.1} parent=1 // pred_fallthru
      _
    %65 = sfence
    %v67 = vld [vmem:[%s0] sm:$0xf]
    %v68 = vld [vmem:[#allocation2] sm:$0xff]
    %v69 = vld [vmem:[#allocation2 + $0x8] sm:$0xff]
    %v70 = vld [vmem:[#allocation2 + $0x10] sm:$0xff]
    %v71 = vld [vmem:[#allocation2 + $0x18] sm:$0xff]
    %v72 = vld [vmem:[#allocation2 + $0x20] sm:$0xff]
    %v73 = vld [vmem:[#allocation2 + $0x28] sm:$0xff]
    %v74 = vld [vmem:[#allocation2 + $0x30] sm:$0xff]
    %v75 = vld [vmem:[#allocation2 + $0x38] sm:$0xff]
    %v76 = vld [vmem:[#allocation2 + $0x40] sm:$0xff]
    %v77 = vld [vmem:[#allocation2 + $0x48] sm:$0xff]
    %v78 = vld [vmem:[#allocation2 + $0x50] sm:$0xff]
    %v79 = vld [vmem:[#allocation2 + $0x58] sm:$0xff]
    %v80 = vld [vmem:[#allocation2 + $0x60] sm:$0xff]
    %v81 = vld [vmem:[#allocation2 + $0x68] sm:$0xff]
    %v82 = vld [vmem:[#allocation2 + $0x70] sm:$0xf]
    %v83 = vld [vmem:[#allocation2 + $0x74] sm:$0xff]
    %v84 = vld [vmem:[#allocation2 + $0x7c] sm:$0xff]
    %v85 = vld [vmem:[#allocation2 + $0x84] sm:$0xff]
    %v86 = vld [vmem:[#allocation2 + $0x8c] sm:$0xff]
    %v87 = vld [vmem:[#allocation2 + $0x94] sm:$0xff]
    %v88 = vld [vmem:[#allocation2 + $0x9c] sm:$0xff]
    %v89 = vld [vmem:[#allocation2 + $0xa4] sm:$0xff]
    %v90 = vld [vmem:[#allocation2 + $0xac] sm:$0xff]
    %v91 = vld [vmem:[#allocation2 + $0xb4] sm:$0xff]
    %v92 = vld [vmem:[#allocation2 + $0xbc] sm:$0xff]
    %v93 = vld [vmem:[#allocation2 + $0xc4] sm:$0xff]
    %v94 = vld [vmem:[#allocation2 + $0xcc] sm:$0xff]
    %v95 = vld [vmem:[#allocation2 + $0xd4] sm:$0xff]
    %v96 = vld [vmem:[#allocation2 + $0xdc] sm:$0xff]
    %v97 = vld [vmem:[#allocation2 + $0xe4] sm:$0xf]
    %v98 = vld [vmem:[#allocation2 + $0xe8] sm:$0xff]
    %v99 = vld [vmem:[#allocation2 + $0xf0] sm:$0xff]
    %v100 = vld [vmem:[#allocation2 + $0xf8] sm:$0xff]
    %v101 = vld [vmem:[#allocation2 + $0x100] sm:$0xff]
    %v102 = vld [vmem:[#allocation2 + $0x108] sm:$0xff]
    %v103 = vld [vmem:[#allocation2 + $0x110] sm:$0xff]
    %v104 = vld [vmem:[#allocation2 + $0x118] sm:$0xff]
    %v105 = vld [vmem:[#allocation2 + $0x120] sm:$0xff]
    %v106 = vld [vmem:[#allocation2 + $0x128] sm:$0xff]
    %v107 = vld [vmem:[#allocation2 + $0x130] sm:$0xff]
    %v108 = vld [vmem:[#allocation2 + $0x138] sm:$0xff]
    %v109 = vld [vmem:[#allocation2 + $0x140] sm:$0xff]
    %v110 = vld [vmem:[#allocation2 + $0x148] sm:$0xff]
    %v111 = vld [vmem:[#allocation2 + $0x150] sm:$0xff]
    %v112 = vld [vmem:[#allocation2 + $0x158] sm:$0xf]
    %v113 = vld [vmem:[#allocation2 + $0x15c] sm:$0xff]
    %v114 = vld [vmem:[#allocation2 + $0x164] sm:$0xff]
    %v115 = vld [vmem:[#allocation2 + $0x16c] sm:$0xff]
    %v116 = vld [vmem:[#allocation2 + $0x174] sm:$0xff]
    %v117 = vld [vmem:[#allocation2 + $0x17c] sm:$0xff]
    %v118 = vld [vmem:[#allocation2 + $0x184] sm:$0xff]
    %v119 = vld [vmem:[#allocation2 + $0x18c] sm:$0xff]
    %v120 = vld [vmem:[#allocation2 + $0x194] sm:$0xff]
    %v121 = vld [vmem:[#allocation2 + $0x19c] sm:$0xff]
    %v122 = vld [vmem:[#allocation2 + $0x1a4] sm:$0xff]
    %v123 = vld [vmem:[#allocation2 + $0x1ac] sm:$0xff]
    %v124 = vld [vmem:[#allocation2 + $0x1b4] sm:$0xff]
    %v125 = vld [vmem:[#allocation2 + $0x1bc] sm:$0xff]
    %v126 = vld [vmem:[#allocation2 + $0x1c4] sm:$0xff]
    %v127 = vld [vmem:[#allocation2 + $0x1cc] sm:$0xf]
    %v128 = vld [vmem:[#allocation2 + $0x1d0] sm:$0xff]
    %v129 = vld [vmem:[#allocation2 + $0x1d8] sm:$0xff]
    %v130 = vld [vmem:[#allocation2 + $0x1e0] sm:$0xff]
    %v131 = vld [vmem:[#allocation2 + $0x1e8] sm:$0xff]
    %v132 = vld [vmem:[#allocation2 + $0x1f0] sm:$0xff]
    %v133 = vld [vmem:[#allocation2 + $0x1f8] sm:$0xff]
    %v134 = vld [vmem:[#allocation2 + $0x200] sm:$0xff]
    %v135 = vld [vmem:[#allocation2 + $0x208] sm:$0xff]
    %v136 = vld [vmem:[#allocation2 + $0x210] sm:$0xff]
    %v137 = vld [vmem:[#allocation2 + $0x218] sm:$0xff]
    %v138 = vld [vmem:[#allocation2 + $0x220] sm:$0xff]
    %v139 = vld [vmem:[#allocation2 + $0x228] sm:$0xff]
    %v140 = vld [vmem:[#allocation2 + $0x230] sm:$0xff]
    %v141 = vld [vmem:[#allocation2 + $0x238] sm:$0xff]
    %v142 = vld [vmem:[#allocation2 + $0x240] sm:$0xf]
    %v143 = vld [vmem:[#allocation2 + $0x244] sm:$0xff]
    %v144 = vld [vmem:[#allocation2 + $0x24c] sm:$0xff]
    %v145 = vld [vmem:[#allocation2 + $0x254] sm:$0xff]
    %v146 = vld [vmem:[#allocation2 + $0x25c] sm:$0xff]
    %v147 = vld [vmem:[#allocation2 + $0x264] sm:$0xff]
    %v148 = vld [vmem:[#allocation2 + $0x26c] sm:$0xff]
    %v149 = vld [vmem:[#allocation2 + $0x274] sm:$0xff]
    %v150 = vld [vmem:[#allocation2 + $0x27c] sm:$0xff]
    %v151 = vld [vmem:[#allocation2 + $0x284] sm:$0xff]
    %v152 = vld [vmem:[#allocation2 + $0x28c] sm:$0xff]
    %v153 = vld [vmem:[#allocation2 + $0x294] sm:$0xff]
    %v154 = vld [vmem:[#allocation2 + $0x29c] sm:$0xff]
    %v155 = vld [vmem:[#allocation2 + $0x2a4] sm:$0xff]
    %v156 = vld [vmem:[#allocation2 + $0x2ac] sm:$0xff]
    %v157 = vld [vmem:[#allocation2 + $0x2b4] sm:$0xf]
    %v248 = vunpack.c.l.b16 %v68
    %v249 = vunpack.c.h.b16 %v68
    %v250 = vunpack.c.l.b16 %v69
    %v251 = vunpack.c.h.b16 %v69
    %v252 = vunpack.c.l.b16 %v70
    %v253 = vunpack.c.h.b16 %v70
    %v254 = vunpack.c.l.b16 %v71
    %v255 = vunpack.c.h.b16 %v71
    %v256 = vunpack.c.l.b16 %v72
    %v257 = vunpack.c.h.b16 %v72
    %v258 = vunpack.c.l.b16 %v73
    %v259 = vunpack.c.h.b16 %v73
    %v260 = vunpack.c.l.b16 %v74
    %v261 = vunpack.c.h.b16 %v74
    %v262 = vunpack.c.l.b16 %v75
    %v263 = vunpack.c.h.b16 %v75
    %v264 = vunpack.c.l.b16 %v76
    %v265 = vunpack.c.h.b16 %v76
    %v266 = vunpack.c.l.b16 %v77
    %v267 = vunpack.c.h.b16 %v77
    %v268 = vunpack.c.l.b16 %v78
    %v269 = vunpack.c.h.b16 %v78
    %v270 = vunpack.c.l.b16 %v79
    %v271 = vunpack.c.h.b16 %v79
    %v272 = vunpack.c.l.b16 %v80
    %v273 = vunpack.c.h.b16 %v80
    %v274 = vunpack.c.l.b16 %v81
    %v275 = vunpack.c.h.b16 %v81
    %v276 = vunpack.c.l.b16 %v82
    %v277 = vunpack.c.l.b16 %v83
    %v278 = vunpack.c.h.b16 %v83
    %v279 = vunpack.c.l.b16 %v84
    %v280 = vunpack.c.h.b16 %v84
    %v281 = vunpack.c.l.b16 %v85
    %v282 = vunpack.c.h.b16 %v85
    %v283 = vunpack.c.l.b16 %v86
    %v284 = vunpack.c.h.b16 %v86
    %v285 = vunpack.c.l.b16 %v87
    %v286 = vunpack.c.h.b16 %v87
    %v287 = vunpack.c.l.b16 %v88
    %v288 = vunpack.c.h.b16 %v88
    %v289 = vunpack.c.l.b16 %v89
    %v290 = vunpack.c.h.b16 %v89
    %v291 = vunpack.c.l.b16 %v90
    %v292 = vunpack.c.h.b16 %v90
    %v293 = vunpack.c.l.b16 %v91
    %v294 = vunpack.c.h.b16 %v91
    %v295 = vunpack.c.l.b16 %v92
    %v296 = vunpack.c.h.b16 %v92
    %v297 = vunpack.c.l.b16 %v93
    %v298 = vunpack.c.h.b16 %v93
    %v299 = vunpack.c.l.b16 %v94
    %v300 = vunpack.c.h.b16 %v94
    %v301 = vunpack.c.l.b16 %v95
    %v302 = vunpack.c.h.b16 %v95
    %v303 = vunpack.c.l.b16 %v96
    %v304 = vunpack.c.h.b16 %v96
    %v305 = vunpack.c.l.b16 %v97
    %v306 = vunpack.c.l.b16 %v98
    %v307 = vunpack.c.h.b16 %v98
    %v308 = vunpack.c.l.b16 %v99
    %v309 = vunpack.c.h.b16 %v99
    %v310 = vunpack.c.l.b16 %v100
    %v311 = vunpack.c.h.b16 %v100
    %v312 = vunpack.c.l.b16 %v101
    %v313 = vunpack.c.h.b16 %v101
    %v314 = vunpack.c.l.b16 %v102
    %v315 = vunpack.c.h.b16 %v102
    %v316 = vunpack.c.l.b16 %v103
    %v317 = vunpack.c.h.b16 %v103
    %v318 = vunpack.c.l.b16 %v104
    %v319 = vunpack.c.h.b16 %v104
    %v320 = vunpack.c.l.b16 %v105
    %v321 = vunpack.c.h.b16 %v105
    %v322 = vunpack.c.l.b16 %v106
    %v323 = vunpack.c.h.b16 %v106
    %v324 = vunpack.c.l.b16 %v107
    %v325 = vunpack.c.h.b16 %v107
    %v326 = vunpack.c.l.b16 %v108
    %v327 = vunpack.c.h.b16 %v108
    %v328 = vunpack.c.l.b16 %v109
    %v329 = vunpack.c.h.b16 %v109
    %v330 = vunpack.c.l.b16 %v110
    %v331 = vunpack.c.h.b16 %v110
    %v332 = vunpack.c.l.b16 %v111
    %v333 = vunpack.c.h.b16 %v111
    %v334 = vunpack.c.l.b16 %v112
    %v335 = vunpack.c.l.b16 %v113
    %v336 = vunpack.c.h.b16 %v113
    %v337 = vunpack.c.l.b16 %v114
    %v338 = vunpack.c.h.b16 %v114
    %v339 = vunpack.c.l.b16 %v115
    %v340 = vunpack.c.h.b16 %v115
    %v341 = vunpack.c.l.b16 %v116
    %v342 = vunpack.c.h.b16 %v116
    %v343 = vunpack.c.l.b16 %v117
    %v344 = vunpack.c.h.b16 %v117
    %v345 = vunpack.c.l.b16 %v118
    %v346 = vunpack.c.h.b16 %v118
    %v347 = vunpack.c.l.b16 %v119
    %v348 = vunpack.c.h.b16 %v119
    %v349 = vunpack.c.l.b16 %v120
    %v350 = vunpack.c.h.b16 %v120
    %v351 = vunpack.c.l.b16 %v121
    %v352 = vunpack.c.h.b16 %v121
    %v353 = vunpack.c.l.b16 %v122
    %v354 = vunpack.c.h.b16 %v122
    %v355 = vunpack.c.l.b16 %v123
    %v356 = vunpack.c.h.b16 %v123
    %v357 = vunpack.c.l.b16 %v124
    %v358 = vunpack.c.h.b16 %v124
    %v359 = vunpack.c.l.b16 %v125
    %v360 = vunpack.c.h.b16 %v125
    %v361 = vunpack.c.l.b16 %v126
    %v362 = vunpack.c.h.b16 %v126
    %v363 = vunpack.c.l.b16 %v127
    %v364 = vunpack.c.l.b16 %v128
    %v365 = vunpack.c.h.b16 %v128
    %v366 = vunpack.c.l.b16 %v129
    %v367 = vunpack.c.h.b16 %v129
    %v368 = vunpack.c.l.b16 %v130
    %v369 = vunpack.c.h.b16 %v130
    %v370 = vunpack.c.l.b16 %v131
    %v371 = vunpack.c.h.b16 %v131
    %v372 = vunpack.c.l.b16 %v132
    %v373 = vunpack.c.h.b16 %v132
    %v374 = vunpack.c.l.b16 %v133
    %v375 = vunpack.c.h.b16 %v133
    %v376 = vunpack.c.l.b16 %v134
    %v377 = vunpack.c.h.b16 %v134
    %v378 = vunpack.c.l.b16 %v135
    %v379 = vunpack.c.h.b16 %v135
    %v380 = vunpack.c.l.b16 %v136
    %v381 = vunpack.c.h.b16 %v136
    %v382 = vunpack.c.l.b16 %v137
    %v383 = vunpack.c.h.b16 %v137
    %v384 = vunpack.c.l.b16 %v138
    %v385 = vunpack.c.h.b16 %v138
    %v386 = vunpack.c.l.b16 %v139
    %v387 = vunpack.c.h.b16 %v139
    %v388 = vunpack.c.l.b16 %v140
    %v389 = vunpack.c.h.b16 %v140
    %v390 = vunpack.c.l.b16 %v141
    %v391 = vunpack.c.h.b16 %v141
    %v392 = vunpack.c.l.b16 %v142
    %v393 = vunpack.c.l.b16 %v143
    %v394 = vunpack.c.h.b16 %v143
    %v395 = vunpack.c.l.b16 %v144
    %v396 = vunpack.c.h.b16 %v144
    %v397 = vunpack.c.l.b16 %v145
    %v398 = vunpack.c.h.b16 %v145
    %v399 = vunpack.c.l.b16 %v146
    %v400 = vunpack.c.h.b16 %v146
    %v401 = vunpack.c.l.b16 %v147
    %v402 = vunpack.c.h.b16 %v147
    %v403 = vunpack.c.l.b16 %v148
    %v404 = vunpack.c.h.b16 %v148
    %v405 = vunpack.c.l.b16 %v149
    %v406 = vunpack.c.h.b16 %v149
    %v407 = vunpack.c.l.b16 %v150
    %v408 = vunpack.c.h.b16 %v150
    %v409 = vunpack.c.l.b16 %v151
    %v410 = vunpack.c.h.b16 %v151
    %v411 = vunpack.c.l.b16 %v152
    %v412 = vunpack.c.h.b16 %v152
    %v413 = vunpack.c.l.b16 %v153
    %v414 = vunpack.c.h.b16 %v153
    %v415 = vunpack.c.l.b16 %v154
    %v416 = vunpack.c.h.b16 %v154
    %v417 = vunpack.c.l.b16 %v155
    %v418 = vunpack.c.h.b16 %v155
    %v419 = vunpack.c.l.b16 %v156
    %v420 = vunpack.c.h.b16 %v156
    %v421 = vunpack.c.l.b16 %v157
    %v422 = vpack.c.b16 %v277, %v248
    %v423 = vpack.c.b16 %v278, %v249
    %v424 = vpack.c.b16 %v279, %v250
    %v425 = vpack.c.b16 %v280, %v251
    %v426 = vpack.c.b16 %v281, %v252
    %v427 = vpack.c.b16 %v282, %v253
    %v428 = vpack.c.b16 %v283, %v254
    %v429 = vpack.c.b16 %v284, %v255
    %v430 = vpack.c.b16 %v285, %v256
    %v431 = vpack.c.b16 %v286, %v257
    %v432 = vpack.c.b16 %v287, %v258
    %v433 = vpack.c.b16 %v288, %v259
    %v434 = vpack.c.b16 %v289, %v260
    %v435 = vpack.c.b16 %v290, %v261
    %v436 = vpack.c.b16 %v291, %v262
    %v437 = vpack.c.b16 %v292, %v263
    %v438 = vpack.c.b16 %v293, %v264
    %v439 = vpack.c.b16 %v294, %v265
    %v440 = vpack.c.b16 %v295, %v266
    %v441 = vpack.c.b16 %v296, %v267
    %v442 = vpack.c.b16 %v297, %v268
    %v443 = vpack.c.b16 %v298, %v269
    %v444 = vpack.c.b16 %v299, %v270
    %v445 = vpack.c.b16 %v300, %v271
    %v446 = vpack.c.b16 %v301, %v272
    %v447 = vpack.c.b16 %v302, %v273
    %v448 = vpack.c.b16 %v303, %v274
    %v449 = vpack.c.b16 %v304, %v275
    %v450 = vpack.c.b16 %v305, %v276
    %v451 = vpack.c.b16 %v335, %v306
    %v452 = vpack.c.b16 %v336, %v307
    %v453 = vpack.c.b16 %v337, %v308
    %v454 = vpack.c.b16 %v338, %v309
    %v455 = vpack.c.b16 %v339, %v310
    %v456 = vpack.c.b16 %v340, %v311
    %v457 = vpack.c.b16 %v341, %v312
    %v458 = vpack.c.b16 %v342, %v313
    %v459 = vpack.c.b16 %v343, %v314
    %v460 = vpack.c.b16 %v344, %v315
    %v461 = vpack.c.b16 %v345, %v316
    %v462 = vpack.c.b16 %v346, %v317
    %v463 = vpack.c.b16 %v347, %v318
    %v464 = vpack.c.b16 %v348, %v319
    %v465 = vpack.c.b16 %v349, %v320
    %v466 = vpack.c.b16 %v350, %v321
    %v467 = vpack.c.b16 %v351, %v322
    %v468 = vpack.c.b16 %v352, %v323
    %v469 = vpack.c.b16 %v353, %v324
    %v470 = vpack.c.b16 %v354, %v325
    %v471 = vpack.c.b16 %v355, %v326
    %v472 = vpack.c.b16 %v356, %v327
    %v473 = vpack.c.b16 %v357, %v328
    %v474 = vpack.c.b16 %v358, %v329
    %v475 = vpack.c.b16 %v359, %v330
    %v476 = vpack.c.b16 %v360, %v331
    %v477 = vpack.c.b16 %v361, %v332
    %v478 = vpack.c.b16 %v362, %v333
    %v479 = vpack.c.b16 %v363, %v334
    %v480 = vpack.c.b16 %v393, %v364
    %v481 = vpack.c.b16 %v394, %v365
    %v482 = vpack.c.b16 %v395, %v366
    %v483 = vpack.c.b16 %v396, %v367
    %v484 = vpack.c.b16 %v397, %v368
    %v485 = vpack.c.b16 %v398, %v369
    %v486 = vpack.c.b16 %v399, %v370
    %v487 = vpack.c.b16 %v400, %v371
    %v488 = vpack.c.b16 %v401, %v372
    %v489 = vpack.c.b16 %v402, %v373
    %v490 = vpack.c.b16 %v403, %v374
    %v491 = vpack.c.b16 %v404, %v375
    %v492 = vpack.c.b16 %v405, %v376
    %v493 = vpack.c.b16 %v406, %v377
    %v494 = vpack.c.b16 %v407, %v378
    %v495 = vpack.c.b16 %v408, %v379
    %v496 = vpack.c.b16 %v409, %v380
    %v497 = vpack.c.b16 %v410, %v381
    %v498 = vpack.c.b16 %v411, %v382
    %v499 = vpack.c.b16 %v412, %v383
    %v500 = vpack.c.b16 %v413, %v384
    %v501 = vpack.c.b16 %v414, %v385
    %v502 = vpack.c.b16 %v415, %v386
    %v503 = vpack.c.b16 %v416, %v387
    %v504 = vpack.c.b16 %v417, %v388
    %v505 = vpack.c.b16 %v418, %v389
    %v506 = vpack.c.b16 %v419, %v390
    %v507 = vpack.c.b16 %v420, %v391
    %v508 = vpack.c.b16 %v421, %v392
    %vm596 = vcmask 392192
    %v598 = vsel %vm596, %v67, 0
    %600 = vmatprep.subr.bf16.mxu0 %v423
    %601 = vmatpush1.bf16.msra.mxu0 %v422
    %602 = vmatprep.subr.bf16.mxu0 %v452
    %603 = vmatpush1.bf16.msra.mxu0 %v451
    %604 = vmatprep.subr.bf16.mxu0 %v481
    %605 = vmatpush1.bf16.msra.mxu0 %v480
    %606 = vmatprep.subr.bf16.mxu0 0
    %607 = vmatpush1.bf16.msra.mxu0 0
    %608 = vmatprep.subr.bf16.mxu0 0
    %609 = vmatpush1.bf16.msra.mxu0 0
    %610 = vmatprep.subr.bf16.mxu0 0
    %611 = vmatpush1.bf16.msra.mxu0 0
    %612 = vmatprep.subr.bf16.mxu0 0
    %613 = vmatpush1.bf16.msra.mxu0 0
    %614 = vmatprep.subr.bf16.mxu0 0
    %615 = vmatpush1.bf16.msra.mxu0 0
    %616 = vmatprep.subr.bf16.mxu0 0
    %617 = vmatpush1.bf16.msra.mxu0 0
    %618 = vmatprep.subr.bf16.mxu0 0
    %619 = vmatpush1.bf16.msra.mxu0 0
    %620 = vmatprep.subr.bf16.mxu0 0
    %621 = vmatpush1.bf16.msra.mxu0 0
    %622 = vmatprep.subr.bf16.mxu0 0
    %623 = vmatpush1.bf16.msra.mxu0 0
    %624 = vmatprep.subr.bf16.mxu0 0
    %625 = vmatpush1.bf16.msra.mxu0 0
    %626 = vmatprep.subr.bf16.mxu0 0
    %627 = vmatpush1.bf16.msra.mxu0 0
    %628 = vmatprep.subr.bf16.mxu0 0
    %629 = vmatpush1.bf16.msra.mxu0 0
    %630 = vmatprep.subr.bf16.mxu0 0
    %631 = vmatpush1.bf16.msra.mxu0 0
    %632 = vmatprep.mubr.bf16.mxu0 0
    %633 = vmatmul.mubr.bf16.gmra.mrb[0].mxu0 %v598
    %v634 = vpop.f32.mrb[0].mxu0
    %v635 = vadd.f32 0.0, %v634
    %v636 = vpop.f32.mrb[0].mxu0
    %v637 = vadd.f32 0.0, %v636
    %v638 = vpop.f32.mrb[0].mxu0
    %v639 = vpop.f32.mrb[0].mxu0
    %640 = vdwg.mxu0
    %641 = vmatprep.subr.bf16.mxu0 %v425
    %642 = vmatpush1.bf16.msra.mxu0 %v424
    %643 = vmatprep.subr.bf16.mxu0 %v454
    %644 = vmatpush1.bf16.msra.mxu0 %v453
    %645 = vmatprep.subr.bf16.mxu0 %v483
    %646 = vmatpush1.bf16.msra.mxu0 %v482
    %647 = vmatprep.subr.bf16.mxu0 0
    %648 = vmatpush1.bf16.msra.mxu0 0
    %649 = vmatprep.subr.bf16.mxu0 0
    %650 = vmatpush1.bf16.msra.mxu0 0
    %651 = vmatprep.subr.bf16.mxu0 0
    %652 = vmatpush1.bf16.msra.mxu0 0
    %653 = vmatprep.subr.bf16.mxu0 0
    %654 = vmatpush1.bf16.msra.mxu0 0
    %655 = vmatprep.subr.bf16.mxu0 0
    %656 = vmatpush1.bf16.msra.mxu0 0
    %657 = vmatprep.subr.bf16.mxu0 0
    %658 = vmatpush1.bf16.msra.mxu0 0
    %659 = vmatprep.subr.bf16.mxu0 0
    %660 = vmatpush1.bf16.msra.mxu0 0
    %661 = vmatprep.subr.bf16.mxu0 0
    %662 = vmatpush1.bf16.msra.mxu0 0
    %663 = vmatprep.subr.bf16.mxu0 0
    %664 = vmatpush1.bf16.msra.mxu0 0
    %665 = vmatprep.subr.bf16.mxu0 0
    %666 = vmatpush1.bf16.msra.mxu0 0
    %667 = vmatprep.subr.bf16.mxu0 0
    %668 = vmatpush1.bf16.msra.mxu0 0
    %669 = vmatprep.subr.bf16.mxu0 0
    %670 = vmatpush1.bf16.msra.mxu0 0
    %671 = vmatprep.subr.bf16.mxu0 0
    %672 = vmatpush1.bf16.msra.mxu0 0
    %673 = vmatprep.mubr.bf16.mxu0 0
    %674 = vmatmul.mubr.bf16.gmra.mrb[0].mxu0 %v598
    %v675 = vpop.f32.mrb[0].mxu0
    %v676 = vadd.f32 0.0, %v675
    %v677 = vpop.f32.mrb[0].mxu0
    %v678 = vadd.f32 0.0, %v677
    %v679 = vpop.f32.mrb[0].mxu0
    %v680 = vpop.f32.mrb[0].mxu0
    %681 = vdwg.mxu0
    %682 = vmatprep.subr.bf16.mxu0 %v427
    %683 = vmatpush1.bf16.msra.mxu0 %v426
    %684 = vmatprep.subr.bf16.mxu0 %v456
    %685 = vmatpush1.bf16.msra.mxu0 %v455
    %686 = vmatprep.subr.bf16.mxu0 %v485
    %687 = vmatpush1.bf16.msra.mxu0 %v484
    %688 = vmatprep.subr.bf16.mxu0 0
    %689 = vmatpush1.bf16.msra.mxu0 0
    %690 = vmatprep.subr.bf16.mxu0 0
    %691 = vmatpush1.bf16.msra.mxu0 0
    %692 = vmatprep.subr.bf16.mxu0 0
    %693 = vmatpush1.bf16.msra.mxu0 0
    %694 = vmatprep.subr.bf16.mxu0 0
    %695 = vmatpush1.bf16.msra.mxu0 0
    %696 = vmatprep.subr.bf16.mxu0 0
    %697 = vmatpush1.bf16.msra.mxu0 0
    %698 = vmatprep.subr.bf16.mxu0 0
    %699 = vmatpush1.bf16.msra.mxu0 0
    %700 = vmatprep.subr.bf16.mxu0 0
    %701 = vmatpush1.bf16.msra.mxu0 0
    %702 = vmatprep.subr.bf16.mxu0 0
    %703 = vmatpush1.bf16.msra.mxu0 0
    %704 = vmatprep.subr.bf16.mxu0 0
    %705 = vmatpush1.bf16.msra.mxu0 0
    %706 = vmatprep.subr.bf16.mxu0 0
    %707 = vmatpush1.bf16.msra.mxu0 0
    %708 = vmatprep.subr.bf16.mxu0 0
    %709 = vmatpush1.bf16.msra.mxu0 0
    %710 = vmatprep.subr.bf16.mxu0 0
    %711 = vmatpush1.bf16.msra.mxu0 0
    %712 = vmatprep.subr.bf16.mxu0 0
    %713 = vmatpush1.bf16.msra.mxu0 0
    %714 = vmatprep.mubr.bf16.mxu0 0
    %715 = vmatmul.mubr.bf16.gmra.mrb[0].mxu0 %v598
    %v716 = vpop.f32.mrb[0].mxu0
    %v717 = vadd.f32 0.0, %v716
    %v718 = vpop.f32.mrb[0].mxu0
    %v719 = vadd.f32 0.0, %v718
    %v720 = vpop.f32.mrb[0].mxu0
    %v721 = vpop.f32.mrb[0].mxu0
    %722 = vdwg.mxu0
    %723 = vmatprep.subr.bf16.mxu0 %v429
    %724 = vmatpush1.bf16.msra.mxu0 %v428
    %725 = vmatprep.subr.bf16.mxu0 %v458
    %726 = vmatpush1.bf16.msra.mxu0 %v457
    %727 = vmatprep.subr.bf16.mxu0 %v487
    %728 = vmatpush1.bf16.msra.mxu0 %v486
    %729 = vmatprep.subr.bf16.mxu0 0
    %730 = vmatpush1.bf16.msra.mxu0 0
    %731 = vmatprep.subr.bf16.mxu0 0
    %732 = vmatpush1.bf16.msra.mxu0 0
    %733 = vmatprep.subr.bf16.mxu0 0
    %734 = vmatpush1.bf16.msra.mxu0 0
    %735 = vmatprep.subr.bf16.mxu0 0
    %736 = vmatpush1.bf16.msra.mxu0 0
    %737 = vmatprep.subr.bf16.mxu0 0
    %738 = vmatpush1.bf16.msra.mxu0 0
    %739 = vmatprep.subr.bf16.mxu0 0
    %740 = vmatpush1.bf16.msra.mxu0 0
    %741 = vmatprep.subr.bf16.mxu0 0
    %742 = vmatpush1.bf16.msra.mxu0 0
    %743 = vmatprep.subr.bf16.mxu0 0
    %744 = vmatpush1.bf16.msra.mxu0 0
    %745 = vmatprep.subr.bf16.mxu0 0
    %746 = vmatpush1.bf16.msra.mxu0 0
    %747 = vmatprep.subr.bf16.mxu0 0
    %748 = vmatpush1.bf16.msra.mxu0 0
    %749 = vmatprep.subr.bf16.mxu0 0
    %750 = vmatpush1.bf16.msra.mxu0 0
    %751 = vmatprep.subr.bf16.mxu0 0
    %752 = vmatpush1.bf16.msra.mxu0 0
    %753 = vmatprep.subr.bf16.mxu0 0
    %754 = vmatpush1.bf16.msra.mxu0 0
    %755 = vmatprep.mubr.bf16.mxu0 0
    %756 = vmatmul.mubr.bf16.gmra.mrb[0].mxu0 %v598
    %v757 = vpop.f32.mrb[0].mxu0
    %v758 = vadd.f32 0.0, %v757
    %v759 = vpop.f32.mrb[0].mxu0
    %v760 = vadd.f32 0.0, %v759
    %v761 = vpop.f32.mrb[0].mxu0
    %v762 = vpop.f32.mrb[0].mxu0
    %763 = vdwg.mxu0
    %764 = vmatprep.subr.bf16.mxu0 %v431
    %765 = vmatpush1.bf16.msra.mxu0 %v430
    %766 = vmatprep.subr.bf16.mxu0 %v460
    %767 = vmatpush1.bf16.msra.mxu0 %v459
    %768 = vmatprep.subr.bf16.mxu0 %v489
    %769 = vmatpush1.bf16.msra.mxu0 %v488
    %770 = vmatprep.subr.bf16.mxu0 0
    %771 = vmatpush1.bf16.msra.mxu0 0
    %772 = vmatprep.subr.bf16.mxu0 0
    %773 = vmatpush1.bf16.msra.mxu0 0
    %774 = vmatprep.subr.bf16.mxu0 0
    %775 = vmatpush1.bf16.msra.mxu0 0
    %776 = vmatprep.subr.bf16.mxu0 0
    %777 = vmatpush1.bf16.msra.mxu0 0
    %778 = vmatprep.subr.bf16.mxu0 0
    %779 = vmatpush1.bf16.msra.mxu0 0
    %780 = vmatprep.subr.bf16.mxu0 0
    %781 = vmatpush1.bf16.msra.mxu0 0
    %782 = vmatprep.subr.bf16.mxu0 0
    %783 = vmatpush1.bf16.msra.mxu0 0
    %784 = vmatprep.subr.bf16.mxu0 0
    %785 = vmatpush1.bf16.msra.mxu0 0
    %786 = vmatprep.subr.bf16.mxu0 0
    %787 = vmatpush1.bf16.msra.mxu0 0
    %788 = vmatprep.subr.bf16.mxu0 0
    %789 = vmatpush1.bf16.msra.mxu0 0
    %790 = vmatprep.subr.bf16.mxu0 0
    %791 = vmatpush1.bf16.msra.mxu0 0
    %792 = vmatprep.subr.bf16.mxu0 0
    %793 = vmatpush1.bf16.msra.mxu0 0
    %794 = vmatprep.subr.bf16.mxu0 0
    %795 = vmatpush1.bf16.msra.mxu0 0
    %796 = vmatprep.mubr.bf16.mxu0 0
    %797 = vmatmul.mubr.bf16.gmra.mrb[0].mxu0 %v598
    %v798 = vpop.f32.mrb[0].mxu0
    %v799 = vadd.f32 0.0, %v798
    %v800 = vpop.f32.mrb[0].mxu0
    %v801 = vadd.f32 0.0, %v800
    %v802 = vpop.f32.mrb[0].mxu0
    %v803 = vpop.f32.mrb[0].mxu0
    %804 = vdwg.mxu0
    %805 = vmatprep.subr.bf16.mxu0 %v433
    %806 = vmatpush1.bf16.msra.mxu0 %v432
    %807 = vmatprep.subr.bf16.mxu0 %v462
    %808 = vmatpush1.bf16.msra.mxu0 %v461
    %809 = vmatprep.subr.bf16.mxu0 %v491
    %810 = vmatpush1.bf16.msra.mxu0 %v490
    %811 = vmatprep.subr.bf16.mxu0 0
    %812 = vmatpush1.bf16.msra.mxu0 0
    %813 = vmatprep.subr.bf16.mxu0 0
    %814 = vmatpush1.bf16.msra.mxu0 0
    %815 = vmatprep.subr.bf16.mxu0 0
    %816 = vmatpush1.bf16.msra.mxu0 0
    %817 = vmatprep.subr.bf16.mxu0 0
    %818 = vmatpush1.bf16.msra.mxu0 0
    %819 = vmatprep.subr.bf16.mxu0 0
    %820 = vmatpush1.bf16.msra.mxu0 0
    %821 = vmatprep.subr.bf16.mxu0 0
    %822 = vmatpush1.bf16.msra.mxu0 0
    %823 = vmatprep.subr.bf16.mxu0 0
    %824 = vmatpush1.bf16.msra.mxu0 0
    %825 = vmatprep.subr.bf16.mxu0 0
    %826 = vmatpush1.bf16.msra.mxu0 0
    %827 = vmatprep.subr.bf16.mxu0 0
    %828 = vmatpush1.bf16.msra.mxu0 0
    %829 = vmatprep.subr.bf16.mxu0 0
    %830 = vmatpush1.bf16.msra.mxu0 0
    %831 = vmatprep.subr.bf16.mxu0 0
    %832 = vmatpush1.bf16.msra.mxu0 0
    %833 = vmatprep.subr.bf16.mxu0 0
    %834 = vmatpush1.bf16.msra.mxu0 0
    %835 = vmatprep.subr.bf16.mxu0 0
    %836 = vmatpush1.bf16.msra.mxu0 0
    %837 = vmatprep.mubr.bf16.mxu0 0
    %838 = vmatmul.mubr.bf16.gmra.mrb[0].mxu0 %v598
    %v839 = vpop.f32.mrb[0].mxu0
    %v840 = vadd.f32 0.0, %v839
    %v841 = vpop.f32.mrb[0].mxu0
    %v842 = vadd.f32 0.0, %v841
    %v843 = vpop.f32.mrb[0].mxu0
    %v844 = vpop.f32.mrb[0].mxu0
    %845 = vdwg.mxu0
    %846 = vmatprep.subr.bf16.mxu0 %v435
    %847 = vmatpush1.bf16.msra.mxu0 %v434
    %848 = vmatprep.subr.bf16.mxu0 %v464
    %849 = vmatpush1.bf16.msra.mxu0 %v463
    %850 = vmatprep.subr.bf16.mxu0 %v493
    %851 = vmatpush1.bf16.msra.mxu0 %v492
    %852 = vmatprep.subr.bf16.mxu0 0
    %853 = vmatpush1.bf16.msra.mxu0 0
    %854 = vmatprep.subr.bf16.mxu0 0
    %855 = vmatpush1.bf16.msra.mxu0 0
    %856 = vmatprep.subr.bf16.mxu0 0
    %857 = vmatpush1.bf16.msra.mxu0 0
    %858 = vmatprep.subr.bf16.mxu0 0
    %859 = vmatpush1.bf16.msra.mxu0 0
    %860 = vmatprep.subr.bf16.mxu0 0
    %861 = vmatpush1.bf16.msra.mxu0 0
    %862 = vmatprep.subr.bf16.mxu0 0
    %863 = vmatpush1.bf16.msra.mxu0 0
    %864 = vmatprep.subr.bf16.mxu0 0
    %865 = vmatpush1.bf16.msra.mxu0 0
    %866 = vmatprep.subr.bf16.mxu0 0
    %867 = vmatpush1.bf16.msra.mxu0 0
    %868 = vmatprep.subr.bf16.mxu0 0
    %869 = vmatpush1.bf16.msra.mxu0 0
    %870 = vmatprep.subr.bf16.mxu0 0
    %871 = vmatpush1.bf16.msra.mxu0 0
    %872 = vmatprep.subr.bf16.mxu0 0
    %873 = vmatpush1.bf16.msra.mxu0 0
    %874 = vmatprep.subr.bf16.mxu0 0
    %875 = vmatpush1.bf16.msra.mxu0 0
    %876 = vmatprep.subr.bf16.mxu0 0
    %877 = vmatpush1.bf16.msra.mxu0 0
    %878 = vmatprep.mubr.bf16.mxu0 0
    %879 = vmatmul.mubr.bf16.gmra.mrb[0].mxu0 %v598
    %v880 = vpop.f32.mrb[0].mxu0
    %v881 = vadd.f32 0.0, %v880
    %v882 = vpop.f32.mrb[0].mxu0
    %v883 = vadd.f32 0.0, %v882
    %v884 = vpop.f32.mrb[0].mxu0
    %v885 = vpop.f32.mrb[0].mxu0
    %886 = vdwg.mxu0
    %887 = vmatprep.subr.bf16.mxu0 %v437
    %888 = vmatpush1.bf16.msra.mxu0 %v436
    %889 = vmatprep.subr.bf16.mxu0 %v466
    %890 = vmatpush1.bf16.msra.mxu0 %v465
    %891 = vmatprep.subr.bf16.mxu0 %v495
    %892 = vmatpush1.bf16.msra.mxu0 %v494
    %893 = vmatprep.subr.bf16.mxu0 0
    %894 = vmatpush1.bf16.msra.mxu0 0
    %895 = vmatprep.subr.bf16.mxu0 0
    %896 = vmatpush1.bf16.msra.mxu0 0
    %897 = vmatprep.subr.bf16.mxu0 0
    %898 = vmatpush1.bf16.msra.mxu0 0
    %899 = vmatprep.subr.bf16.mxu0 0
    %900 = vmatpush1.bf16.msra.mxu0 0
    %901 = vmatprep.subr.bf16.mxu0 0
    %902 = vmatpush1.bf16.msra.mxu0 0
    %903 = vmatprep.subr.bf16.mxu0 0
    %904 = vmatpush1.bf16.msra.mxu0 0
    %905 = vmatprep.subr.bf16.mxu0 0
    %906 = vmatpush1.bf16.msra.mxu0 0
    %907 = vmatprep.subr.bf16.mxu0 0
    %908 = vmatpush1.bf16.msra.mxu0 0
    %909 = vmatprep.subr.bf16.mxu0 0
    %910 = vmatpush1.bf16.msra.mxu0 0
    %911 = vmatprep.subr.bf16.mxu0 0
    %912 = vmatpush1.bf16.msra.mxu0 0
    %913 = vmatprep.subr.bf16.mxu0 0
    %914 = vmatpush1.bf16.msra.mxu0 0
    %915 = vmatprep.subr.bf16.mxu0 0
    %916 = vmatpush1.bf16.msra.mxu0 0
    %917 = vmatprep.subr.bf16.mxu0 0
    %918 = vmatpush1.bf16.msra.mxu0 0
    %919 = vmatprep.mubr.bf16.mxu0 0
    %920 = vmatmul.mubr.bf16.gmra.mrb[0].mxu0 %v598
    %v921 = vpop.f32.mrb[0].mxu0
    %v922 = vadd.f32 0.0, %v921
    %v923 = vpop.f32.mrb[0].mxu0
    %v924 = vadd.f32 0.0, %v923
    %v925 = vpop.f32.mrb[0].mxu0
    %v926 = vpop.f32.mrb[0].mxu0
    %927 = vdwg.mxu0
    %928 = vmatprep.subr.bf16.mxu0 %v439
    %929 = vmatpush1.bf16.msra.mxu0 %v438
    %930 = vmatprep.subr.bf16.mxu0 %v468
    %931 = vmatpush1.bf16.msra.mxu0 %v467
    %932 = vmatprep.subr.bf16.mxu0 %v497
    %933 = vmatpush1.bf16.msra.mxu0 %v496
    %934 = vmatprep.subr.bf16.mxu0 0
    %935 = vmatpush1.bf16.msra.mxu0 0
    %936 = vmatprep.subr.bf16.mxu0 0
    %937 = vmatpush1.bf16.msra.mxu0 0
    %938 = vmatprep.subr.bf16.mxu0 0
    %939 = vmatpush1.bf16.msra.mxu0 0
    %940 = vmatprep.subr.bf16.mxu0 0
    %941 = vmatpush1.bf16.msra.mxu0 0
    %942 = vmatprep.subr.bf16.mxu0 0
    %943 = vmatpush1.bf16.msra.mxu0 0
    %944 = vmatprep.subr.bf16.mxu0 0
    %945 = vmatpush1.bf16.msra.mxu0 0
    %946 = vmatprep.subr.bf16.mxu0 0
    %947 = vmatpush1.bf16.msra.mxu0 0
    %948 = vmatprep.subr.bf16.mxu0 0
    %949 = vmatpush1.bf16.msra.mxu0 0
    %950 = vmatprep.subr.bf16.mxu0 0
    %951 = vmatpush1.bf16.msra.mxu0 0
    %952 = vmatprep.subr.bf16.mxu0 0
    %953 = vmatpush1.bf16.msra.mxu0 0
    %954 = vmatprep.subr.bf16.mxu0 0
    %955 = vmatpush1.bf16.msra.mxu0 0
    %956 = vmatprep.subr.bf16.mxu0 0
    %957 = vmatpush1.bf16.msra.mxu0 0
    %958 = vmatprep.subr.bf16.mxu0 0
    %959 = vmatpush1.bf16.msra.mxu0 0
    %960 = vmatprep.mubr.bf16.mxu0 0
    %961 = vmatmul.mubr.bf16.gmra.mrb[0].mxu0 %v598
    %v962 = vpop.f32.mrb[0].mxu0
    %v963 = vadd.f32 0.0, %v962
    %v964 = vpop.f32.mrb[0].mxu0
    %v965 = vadd.f32 0.0, %v964
    %v966 = vpop.f32.mrb[0].mxu0
    %v967 = vpop.f32.mrb[0].mxu0
    %968 = vdwg.mxu0
    %969 = vmatprep.subr.bf16.mxu0 %v441
    %970 = vmatpush1.bf16.msra.mxu0 %v440
    %971 = vmatprep.subr.bf16.mxu0 %v470
    %972 = vmatpush1.bf16.msra.mxu0 %v469
    %973 = vmatprep.subr.bf16.mxu0 %v499
    %974 = vmatpush1.bf16.msra.mxu0 %v498
    %975 = vmatprep.subr.bf16.mxu0 0
    %976 = vmatpush1.bf16.msra.mxu0 0
    %977 = vmatprep.subr.bf16.mxu0 0
    %978 = vmatpush1.bf16.msra.mxu0 0
    %979 = vmatprep.subr.bf16.mxu0 0
    %980 = vmatpush1.bf16.msra.mxu0 0
    %981 = vmatprep.subr.bf16.mxu0 0
    %982 = vmatpush1.bf16.msra.mxu0 0
    %983 = vmatprep.subr.bf16.mxu0 0
    %984 = vmatpush1.bf16.msra.mxu0 0
    %985 = vmatprep.subr.bf16.mxu0 0
    %986 = vmatpush1.bf16.msra.mxu0 0
    %987 = vmatprep.subr.bf16.mxu0 0
    %988 = vmatpush1.bf16.msra.mxu0 0
    %989 = vmatprep.subr.bf16.mxu0 0
    %990 = vmatpush1.bf16.msra.mxu0 0
    %991 = vmatprep.subr.bf16.mxu0 0
    %992 = vmatpush1.bf16.msra.mxu0 0
    %993 = vmatprep.subr.bf16.mxu0 0
    %994 = vmatpush1.bf16.msra.mxu0 0
    %995 = vmatprep.subr.bf16.mxu0 0
    %996 = vmatpush1.bf16.msra.mxu0 0
    %997 = vmatprep.subr.bf16.mxu0 0
    %998 = vmatpush1.bf16.msra.mxu0 0
    %999 = vmatprep.subr.bf16.mxu0 0
    %1000 = vmatpush1.bf16.msra.mxu0 0
    %1001 = vmatprep.mubr.bf16.mxu0 0
    %1002 = vmatmul.mubr.bf16.gmra.mrb[0].mxu0 %v598
    %v1003 = vpop.f32.mrb[0].mxu0
    %v1004 = vadd.f32 0.0, %v1003
    %v1005 = vpop.f32.mrb[0].mxu0
    %v1006 = vadd.f32 0.0, %v1005
    %v1007 = vpop.f32.mrb[0].mxu0
    %v1008 = vpop.f32.mrb[0].mxu0
    %1009 = vdwg.mxu0
    %1010 = vmatprep.subr.bf16.mxu0 %v443
    %1011 = vmatpush1.bf16.msra.mxu0 %v442
    %1012 = vmatprep.subr.bf16.mxu0 %v472
    %1013 = vmatpush1.bf16.msra.mxu0 %v471
    %1014 = vmatprep.subr.bf16.mxu0 %v501
    %1015 = vmatpush1.bf16.msra.mxu0 %v500
    %1016 = vmatprep.subr.bf16.mxu0 0
    %1017 = vmatpush1.bf16.msra.mxu0 0
    %1018 = vmatprep.subr.bf16.mxu0 0
    %1019 = vmatpush1.bf16.msra.mxu0 0
    %1020 = vmatprep.subr.bf16.mxu0 0
    %1021 = vmatpush1.bf16.msra.mxu0 0
    %1022 = vmatprep.subr.bf16.mxu0 0
    %1023 = vmatpush1.bf16.msra.mxu0 0
    %1024 = vmatprep.subr.bf16.mxu0 0
    %1025 = vmatpush1.bf16.msra.mxu0 0
    %1026 = vmatprep.subr.bf16.mxu0 0
    %1027 = vmatpush1.bf16.msra.mxu0 0
    %1028 = vmatprep.subr.bf16.mxu0 0
    %1029 = vmatpush1.bf16.msra.mxu0 0
    %1030 = vmatprep.subr.bf16.mxu0 0
    %1031 = vmatpush1.bf16.msra.mxu0 0
    %1032 = vmatprep.subr.bf16.mxu0 0
    %1033 = vmatpush1.bf16.msra.mxu0 0
    %1034 = vmatprep.subr.bf16.mxu0 0
    %1035 = vmatpush1.bf16.msra.mxu0 0
    %1036 = vmatprep.subr.bf16.mxu0 0
    %1037 = vmatpush1.bf16.msra.mxu0 0
    %1038 = vmatprep.subr.bf16.mxu0 0
    %1039 = vmatpush1.bf16.msra.mxu0 0
    %1040 = vmatprep.subr.bf16.mxu0 0
    %1041 = vmatpush1.bf16.msra.mxu0 0
    %1042 = vmatprep.mubr.bf16.mxu0 0
    %1043 = vmatmul.mubr.bf16.gmra.mrb[0].mxu0 %v598
    %v1044 = vpop.f32.mrb[0].mxu0
    %v1045 = vadd.f32 0.0, %v1044
    %v1046 = vpop.f32.mrb[0].mxu0
    %v1047 = vadd.f32 0.0, %v1046
    %v1048 = vpop.f32.mrb[0].mxu0
    %v1049 = vpop.f32.mrb[0].mxu0
    %1050 = vdwg.mxu0
    %1051 = vmatprep.subr.bf16.mxu0 %v445
    %1052 = vmatpush1.bf16.msra.mxu0 %v444
    %1053 = vmatprep.subr.bf16.mxu0 %v474
    %1054 = vmatpush1.bf16.msra.mxu0 %v473
    %1055 = vmatprep.subr.bf16.mxu0 %v503
    %1056 = vmatpush1.bf16.msra.mxu0 %v502
    %1057 = vmatprep.subr.bf16.mxu0 0
    %1058 = vmatpush1.bf16.msra.mxu0 0
    %1059 = vmatprep.subr.bf16.mxu0 0
    %1060 = vmatpush1.bf16.msra.mxu0 0
    %1061 = vmatprep.subr.bf16.mxu0 0
    %1062 = vmatpush1.bf16.msra.mxu0 0
    %1063 = vmatprep.subr.bf16.mxu0 0
    %1064 = vmatpush1.bf16.msra.mxu0 0
    %1065 = vmatprep.subr.bf16.mxu0 0
    %1066 = vmatpush1.bf16.msra.mxu0 0
    %1067 = vmatprep.subr.bf16.mxu0 0
    %1068 = vmatpush1.bf16.msra.mxu0 0
    %1069 = vmatprep.subr.bf16.mxu0 0
    %1070 = vmatpush1.bf16.msra.mxu0 0
    %1071 = vmatprep.subr.bf16.mxu0 0
    %1072 = vmatpush1.bf16.msra.mxu0 0
    %1073 = vmatprep.subr.bf16.mxu0 0
    %1074 = vmatpush1.bf16.msra.mxu0 0
    %1075 = vmatprep.subr.bf16.mxu0 0
    %1076 = vmatpush1.bf16.msra.mxu0 0
    %1077 = vmatprep.subr.bf16.mxu0 0
    %1078 = vmatpush1.bf16.msra.mxu0 0
    %1079 = vmatprep.subr.bf16.mxu0 0
    %1080 = vmatpush1.bf16.msra.mxu0 0
    %1081 = vmatprep.subr.bf16.mxu0 0
    %1082 = vmatpush1.bf16.msra.mxu0 0
    %1083 = vmatprep.mubr.bf16.mxu0 0
    %1084 = vmatmul.mubr.bf16.gmra.mrb[0].mxu0 %v598
    %v1085 = vpop.f32.mrb[0].mxu0
    %v1086 = vadd.f32 0.0, %v1085
    %v1087 = vpop.f32.mrb[0].mxu0
    %v1088 = vadd.f32 0.0, %v1087
    %v1089 = vpop.f32.mrb[0].mxu0
    %v1090 = vpop.f32.mrb[0].mxu0
    %1091 = vdwg.mxu0
    %1092 = vmatprep.subr.bf16.mxu0 %v447
    %1093 = vmatpush1.bf16.msra.mxu0 %v446
    %1094 = vmatprep.subr.bf16.mxu0 %v476
    %1095 = vmatpush1.bf16.msra.mxu0 %v475
    %1096 = vmatprep.subr.bf16.mxu0 %v505
    %1097 = vmatpush1.bf16.msra.mxu0 %v504
    %1098 = vmatprep.subr.bf16.mxu0 0
    %1099 = vmatpush1.bf16.msra.mxu0 0
    %1100 = vmatprep.subr.bf16.mxu0 0
    %1101 = vmatpush1.bf16.msra.mxu0 0
    %1102 = vmatprep.subr.bf16.mxu0 0
    %1103 = vmatpush1.bf16.msra.mxu0 0
    %1104 = vmatprep.subr.bf16.mxu0 0
    %1105 = vmatpush1.bf16.msra.mxu0 0
    %1106 = vmatprep.subr.bf16.mxu0 0
    %1107 = vmatpush1.bf16.msra.mxu0 0
    %1108 = vmatprep.subr.bf16.mxu0 0
    %1109 = vmatpush1.bf16.msra.mxu0 0
    %1110 = vmatprep.subr.bf16.mxu0 0
    %1111 = vmatpush1.bf16.msra.mxu0 0
    %1112 = vmatprep.subr.bf16.mxu0 0
    %1113 = vmatpush1.bf16.msra.mxu0 0
    %1114 = vmatprep.subr.bf16.mxu0 0
    %1115 = vmatpush1.bf16.msra.mxu0 0
    %1116 = vmatprep.subr.bf16.mxu0 0
    %1117 = vmatpush1.bf16.msra.mxu0 0
    %1118 = vmatprep.subr.bf16.mxu0 0
    %1119 = vmatpush1.bf16.msra.mxu0 0
    %1120 = vmatprep.subr.bf16.mxu0 0
    %1121 = vmatpush1.bf16.msra.mxu0 0
    %1122 = vmatprep.subr.bf16.mxu0 0
    %1123 = vmatpush1.bf16.msra.mxu0 0
    %1124 = vmatprep.mubr.bf16.mxu0 0
    %1125 = vmatmul.mubr.bf16.gmra.mrb[0].mxu0 %v598
    %v1126 = vpop.f32.mrb[0].mxu0
    %v1127 = vadd.f32 0.0, %v1126
    %v1128 = vpop.f32.mrb[0].mxu0
    %v1129 = vadd.f32 0.0, %v1128
    %v1130 = vpop.f32.mrb[0].mxu0
    %v1131 = vpop.f32.mrb[0].mxu0
    %1132 = vdwg.mxu0
    %1133 = vmatprep.subr.bf16.mxu0 %v449
    %1134 = vmatpush1.bf16.msra.mxu0 %v448
    %1135 = vmatprep.subr.bf16.mxu0 %v478
    %1136 = vmatpush1.bf16.msra.mxu0 %v477
    %1137 = vmatprep.subr.bf16.mxu0 %v507
    %1138 = vmatpush1.bf16.msra.mxu0 %v506
    %1139 = vmatprep.subr.bf16.mxu0 0
    %1140 = vmatpush1.bf16.msra.mxu0 0
    %1141 = vmatprep.subr.bf16.mxu0 0
    %1142 = vmatpush1.bf16.msra.mxu0 0
    %1143 = vmatprep.subr.bf16.mxu0 0
    %1144 = vmatpush1.bf16.msra.mxu0 0
    %1145 = vmatprep.subr.bf16.mxu0 0
    %1146 = vmatpush1.bf16.msra.mxu0 0
    %1147 = vmatprep.subr.bf16.mxu0 0
    %1148 = vmatpush1.bf16.msra.mxu0 0
    %1149 = vmatprep.subr.bf16.mxu0 0
    %1150 = vmatpush1.bf16.msra.mxu0 0
    %1151 = vmatprep.subr.bf16.mxu0 0
    %1152 = vmatpush1.bf16.msra.mxu0 0
    %1153 = vmatprep.subr.bf16.mxu0 0
    %1154 = vmatpush1.bf16.msra.mxu0 0
    %1155 = vmatprep.subr.bf16.mxu0 0
    %1156 = vmatpush1.bf16.msra.mxu0 0
    %1157 = vmatprep.subr.bf16.mxu0 0
    %1158 = vmatpush1.bf16.msra.mxu0 0
    %1159 = vmatprep.subr.bf16.mxu0 0
    %1160 = vmatpush1.bf16.msra.mxu0 0
    %1161 = vmatprep.subr.bf16.mxu0 0
    %1162 = vmatpush1.bf16.msra.mxu0 0
    %1163 = vmatprep.subr.bf16.mxu0 0
    %1164 = vmatpush1.bf16.msra.mxu0 0
    %1165 = vmatprep.mubr.bf16.mxu0 0
    %1166 = vmatmul.mubr.bf16.gmra.mrb[0].mxu0 %v598
    %v1167 = vpop.f32.mrb[0].mxu0
    %v1168 = vadd.f32 0.0, %v1167
    %v1169 = vpop.f32.mrb[0].mxu0
    %v1170 = vadd.f32 0.0, %v1169
    %v1171 = vpop.f32.mrb[0].mxu0
    %v1172 = vpop.f32.mrb[0].mxu0
    %1173 = vdwg.mxu0
    %1174 = vmatprep.subr.bf16.mxu0 0
    %1175 = vmatpush1.bf16.msra.mxu0 %v450
    %1176 = vmatprep.subr.bf16.mxu0 0
    %1177 = vmatpush1.bf16.msra.mxu0 %v479
    %1178 = vmatprep.subr.bf16.mxu0 0
    %1179 = vmatpush1.bf16.msra.mxu0 %v508
    %1180 = vmatprep.subr.bf16.mxu0 0
    %1181 = vmatpush1.bf16.msra.mxu0 0
    %1182 = vmatprep.subr.bf16.mxu0 0
    %1183 = vmatpush1.bf16.msra.mxu0 0
    %1184 = vmatprep.subr.bf16.mxu0 0
    %1185 = vmatpush1.bf16.msra.mxu0 0
    %1186 = vmatprep.subr.bf16.mxu0 0
    %1187 = vmatpush1.bf16.msra.mxu0 0
    %1188 = vmatprep.subr.bf16.mxu0 0
    %1189 = vmatpush1.bf16.msra.mxu0 0
    %1190 = vmatprep.subr.bf16.mxu0 0
    %1191 = vmatpush1.bf16.msra.mxu0 0
    %1192 = vmatprep.subr.bf16.mxu0 0
    %1193 = vmatpush1.bf16.msra.mxu0 0
    %1194 = vmatprep.subr.bf16.mxu0 0
    %1195 = vmatpush1.bf16.msra.mxu0 0
    %1196 = vmatprep.subr.bf16.mxu0 0
    %1197 = vmatpush1.bf16.msra.mxu0 0
    %1198 = vmatprep.subr.bf16.mxu0 0
    %1199 = vmatpush1.bf16.msra.mxu0 0
    %1200 = vmatprep.subr.bf16.mxu0 0
    %1201 = vmatpush1.bf16.msra.mxu0 0
    %1202 = vmatprep.subr.bf16.mxu0 0
    %1203 = vmatpush1.bf16.msra.mxu0 0
    %1204 = vmatprep.subr.bf16.mxu0 0
    %1205 = vmatpush1.bf16.msra.mxu0 0
    %1206 = vmatprep.mubr.bf16.mxu0 0
    %1207 = vmatmul.mubr.bf16.gmra.mrb[0].mxu0 %v598
    %v1208 = vpop.f32.mrb[0].mxu0
    %v1209 = vadd.f32 0.0, %v1208
    %v1210 = vpop.f32.mrb[0].mxu0
    %v1211 = vpop.f32.mrb[0].mxu0
    %v1212 = vpop.f32.mrb[0].mxu0
    %1213 = vdwg.mxu0
    %1217 = vrot.lane.b32.xlu0 %v637, 16
    %v1218 = vpop.permute.xlu0 %1217
    %1219 = vrot.lane.b32.xlu0 %v676, 16
    %v1220 = vpop.permute.xlu0 %1219
    %1221 = vrot.lane.b32.xlu0 %v678, 16
    %v1222 = vpop.permute.xlu0 %1221
    %vm1223 = vcmask 130048
    %v1224 = vsel %vm1223, %v1218, %v1220
    %v1225 = vsel %vm1223, %v1220, %v1222
    %1230 = vrot.lane.b32.xlu0 %v678, 32
    %v1231 = vpop.permute.xlu0 %1230
    %1232 = vrot.lane.b32.xlu0 %v717, 32
    %v1233 = vpop.permute.xlu0 %1232
    %1234 = vrot.lane.b32.xlu0 %v719, 32
    %v1235 = vpop.permute.xlu0 %1234
    %vm1236 = vcmask 261120
    %v1237 = vsel %vm1236, %v1231, %v1233
    %v1238 = vsel %vm1236, %v1233, %v1235
    %1243 = vrot.lane.b32.xlu0 %v719, 48
    %v1244 = vpop.permute.xlu0 %1243
    %1245 = vrot.lane.b32.xlu0 %v758, 48
    %v1246 = vpop.permute.xlu0 %1245
    %1247 = vrot.lane.b32.xlu0 %v760, 48
    %v1248 = vpop.permute.xlu0 %1247
    %v1249 = vsel %vm596, %v1244, %v1246
    %v1250 = vsel %vm596, %v1246, %v1248
    %1255 = vrot.lane.b32.xlu0 %v760, 64
    %v1256 = vpop.permute.xlu0 %1255
    %1257 = vrot.lane.b32.xlu0 %v799, 64
    %v1258 = vpop.permute.xlu0 %1257
    %1259 = vrot.lane.b32.xlu0 %v801, 64
    %v1260 = vpop.permute.xlu0 %1259
    %vm1261 = vcmask 523264
    %v1262 = vsel %vm1261, %v1256, %v1258
    %v1263 = vsel %vm1261, %v1258, %v1260
    %1268 = vrot.lane.b32.xlu0 %v801, 80
    %v1269 = vpop.permute.xlu0 %1268
    %1270 = vrot.lane.b32.xlu0 %v840, 80
    %v1271 = vpop.permute.xlu0 %1270
    %1272 = vrot.lane.b32.xlu0 %v842, 80
    %v1273 = vpop.permute.xlu0 %1272
    %vm1274 = vcmask 654336
    %v1275 = vsel %vm1274, %v1269, %v1271
    %v1276 = vsel %vm1274, %v1271, %v1273
    %1281 = vrot.lane.b32.xlu0 %v842, 96
    %v1282 = vpop.permute.xlu0 %1281
    %1283 = vrot.lane.b32.xlu0 %v881, 96
    %v1284 = vpop.permute.xlu0 %1283
    %1285 = vrot.lane.b32.xlu0 %v883, 96
    %v1286 = vpop.permute.xlu0 %1285
    %vm1287 = vcmask 785408
    %v1288 = vsel %vm1287, %v1282, %v1284
    %v1289 = vsel %vm1287, %v1284, %v1286
    %1293 = vrot.lane.b32.xlu0 %v883, 112
    %v1294 = vpop.permute.xlu0 %1293
    %1295 = vrot.lane.b32.xlu0 %v922, 112
    %v1296 = vpop.permute.xlu0 %1295
    %vm1297 = vcmask 916480
    %v1298 = vsel %vm1297, %v1294, %v1296
    %1304 = vrot.lane.b32.xlu0 %v963, 16
    %v1305 = vpop.permute.xlu0 %1304
    %1306 = vrot.lane.b32.xlu0 %v965, 16
    %v1307 = vpop.permute.xlu0 %1306
    %1308 = vrot.lane.b32.xlu0 %v1004, 16
    %v1309 = vpop.permute.xlu0 %1308
    %v1310 = vsel %vm1223, %v1305, %v1307
    %v1311 = vsel %vm1223, %v1307, %v1309
    %1316 = vrot.lane.b32.xlu0 %v1004, 32
    %v1317 = vpop.permute.xlu0 %1316
    %1318 = vrot.lane.b32.xlu0 %v1006, 32
    %v1319 = vpop.permute.xlu0 %1318
    %1320 = vrot.lane.b32.xlu0 %v1045, 32
    %v1321 = vpop.permute.xlu0 %1320
    %v1322 = vsel %vm1236, %v1317, %v1319
    %v1323 = vsel %vm1236, %v1319, %v1321
    %1328 = vrot.lane.b32.xlu0 %v1045, 48
    %v1329 = vpop.permute.xlu0 %1328
    %1330 = vrot.lane.b32.xlu0 %v1047, 48
    %v1331 = vpop.permute.xlu0 %1330
    %1332 = vrot.lane.b32.xlu0 %v1086, 48
    %v1333 = vpop.permute.xlu0 %1332
    %v1334 = vsel %vm596, %v1329, %v1331
    %v1335 = vsel %vm596, %v1331, %v1333
    %1340 = vrot.lane.b32.xlu0 %v1086, 64
    %v1341 = vpop.permute.xlu0 %1340
    %1342 = vrot.lane.b32.xlu0 %v1088, 64
    %v1343 = vpop.permute.xlu0 %1342
    %1344 = vrot.lane.b32.xlu0 %v1127, 64
    %v1345 = vpop.permute.xlu0 %1344
    %v1346 = vsel %vm1261, %v1341, %v1343
    %v1347 = vsel %vm1261, %v1343, %v1345
    %1352 = vrot.lane.b32.xlu0 %v1127, 80
    %v1353 = vpop.permute.xlu0 %1352
    %1354 = vrot.lane.b32.xlu0 %v1129, 80
    %v1355 = vpop.permute.xlu0 %1354
    %1356 = vrot.lane.b32.xlu0 %v1168, 80
    %v1357 = vpop.permute.xlu0 %1356
    %v1358 = vsel %vm1274, %v1353, %v1355
    %v1359 = vsel %vm1274, %v1355, %v1357
    %1364 = vrot.lane.b32.xlu0 %v1168, 96
    %v1365 = vpop.permute.xlu0 %1364
    %1366 = vrot.lane.b32.xlu0 %v1170, 96
    %v1367 = vpop.permute.xlu0 %1366
    %1368 = vrot.lane.b32.xlu0 %v1209, 96
    %v1369 = vpop.permute.xlu0 %1368
    %v1370 = vsel %vm1287, %v1365, %v1367
    %v1371 = vsel %vm1287, %v1367, %v1369
    %v1374 = vadd.f32 %v635, %v1224
    %v1375 = vadd.f32 %v1374, %v1237
    %v1376 = vadd.f32 %v1375, %v1249
    %v1377 = vadd.f32 %v1376, %v1262
    %v1378 = vadd.f32 %v1377, %v1275
    %v1379 = vadd.f32 %v1378, %v1288
    %v1380 = vadd.f32 %v1379, %v1298
    %v1381 = vadd.f32 %v1380, %v924
    %v1382 = vadd.f32 %v1381, %v1310
    %v1383 = vadd.f32 %v1382, %v1322
    %v1384 = vadd.f32 %v1383, %v1334
    %v1385 = vadd.f32 %v1384, %v1346
    %v1386 = vadd.f32 %v1385, %v1358
    %v1387 = vadd.f32 %v1386, %v1370
    %v1388 = vrot.slane %v1387, 4
    %v1389 = vadd.f32 %v1387, %v1388
    %v1390 = vrot.slane %v1389, 2
    %v1391 = vadd.f32 %v1389, %v1390
    %v1392 = vrot.slane %v1391, 1
    %v1393 = vadd.f32 %v1391, %v1392
    %v1394 = vsel %vm1297, %v637, 0.0
    %v1395 = vsel %vm1297, %v1225, 0.0
    %v1396 = vadd.f32 %v1394, %v1395
    %v1397 = vsel %vm1297, %v1238, 0.0
    %v1398 = vadd.f32 %v1396, %v1397
    %v1399 = vsel %vm1297, %v1250, 0.0
    %v1400 = vadd.f32 %v1398, %v1399
    %v1401 = vsel %vm1297, %v1263, 0.0
    %v1402 = vadd.f32 %v1400, %v1401
    %v1403 = vsel %vm1297, %v1276, 0.0
    %v1404 = vadd.f32 %v1402, %v1403
    %v1405 = vsel %vm1297, %v1289, 0.0
    %v1406 = vadd.f32 %v1404, %v1405
    %v1407 = vsel %vm1297, %v1296, 0.0
    %v1408 = vadd.f32 %v1406, %v1407
    %v1409 = vsel %vm1297, %v963, 0.0
    %v1410 = vadd.f32 %v1408, %v1409
    %v1411 = vsel %vm1297, %v1311, 0.0
    %v1412 = vadd.f32 %v1410, %v1411
    %v1413 = vsel %vm1297, %v1323, 0.0
    %v1414 = vadd.f32 %v1412, %v1413
    %v1415 = vsel %vm1297, %v1335, 0.0
    %v1416 = vadd.f32 %v1414, %v1415
    %v1417 = vsel %vm1297, %v1347, 0.0
    %v1418 = vadd.f32 %v1416, %v1417
    %v1419 = vsel %vm1297, %v1359, 0.0
    %v1420 = vadd.f32 %v1418, %v1419
    %v1421 = vsel %vm1297, %v1371, 0.0
    %v1422 = vadd.f32 %v1420, %v1421
    %v1423 = vrot.slane %v1422, 4
    %v1424 = vadd.f32 %v1422, %v1423
    %v1425 = vrot.slane %v1424, 2
    %v1426 = vadd.f32 %v1424, %v1425
    %v1427 = vrot.slane %v1426, 1
    %v1428 = vadd.f32 %v1426, %v1427
    %v1429 = vmul.f32 %v635, %v635
    %v1430 = vmul.f32 %v637, %v637
    %v1431 = vmul.f32 %v1224, %v1224
    %v1432 = vmul.f32 %v1225, %v1225
    %v1433 = vmul.f32 %v1237, %v1237
    %v1434 = vmul.f32 %v1238, %v1238
    %v1435 = vmul.f32 %v1249, %v1249
    %v1436 = vmul.f32 %v1250, %v1250
    %v1437 = vmul.f32 %v1262, %v1262
    %v1438 = vmul.f32 %v1263, %v1263
    %v1439 = vmul.f32 %v1275, %v1275
    %v1440 = vmul.f32 %v1276, %v1276
    %v1441 = vmul.f32 %v1288, %v1288
    %v1442 = vmul.f32 %v1289, %v1289
    %v1443 = vmul.f32 %v1298, %v1298
    %v1444 = vmul.f32 %v1296, %v1296
    %v1445 = vmul.f32 %v924, %v924
    %v1446 = vmul.f32 %v963, %v963
    %v1447 = vmul.f32 %v1310, %v1310
    %v1448 = vmul.f32 %v1311, %v1311
    %v1449 = vmul.f32 %v1322, %v1322
    %v1450 = vmul.f32 %v1323, %v1323
    %v1451 = vmul.f32 %v1334, %v1334
    %v1452 = vmul.f32 %v1335, %v1335
    %v1453 = vmul.f32 %v1346, %v1346
    %v1454 = vmul.f32 %v1347, %v1347
    %v1455 = vmul.f32 %v1358, %v1358
    %v1456 = vmul.f32 %v1359, %v1359
    %v1457 = vmul.f32 %v1370, %v1370
    %v1458 = vmul.f32 %v1371, %v1371
    %v1459 = vadd.f32 %v1429, %v1431
    %v1460 = vadd.f32 %v1459, %v1433
    %v1461 = vadd.f32 %v1460, %v1435
    %v1462 = vadd.f32 %v1461, %v1437
    %v1463 = vadd.f32 %v1462, %v1439
    %v1464 = vadd.f32 %v1463, %v1441
    %v1465 = vadd.f32 %v1464, %v1443
    %v1466 = vadd.f32 %v1465, %v1445
    %v1467 = vadd.f32 %v1466, %v1447
    %v1468 = vadd.f32 %v1467, %v1449
    %v1469 = vadd.f32 %v1468, %v1451
    %v1470 = vadd.f32 %v1469, %v1453
    %v1471 = vadd.f32 %v1470, %v1455
    %v1472 = vadd.f32 %v1471, %v1457
    %v1473 = vrot.slane %v1472, 4
    %v1474 = vadd.f32 %v1472, %v1473
    %v1475 = vrot.slane %v1474, 2
    %v1476 = vadd.f32 %v1474, %v1475
    %v1477 = vrot.slane %v1476, 1
    %v1478 = vadd.f32 %v1476, %v1477
    %v1479 = vsel %vm1297, %v1430, 0.0
    %v1480 = vsel %vm1297, %v1432, 0.0
    %v1481 = vadd.f32 %v1479, %v1480
    %v1482 = vsel %vm1297, %v1434, 0.0
    %v1483 = vadd.f32 %v1481, %v1482
    %v1484 = vsel %vm1297, %v1436, 0.0
    %v1485 = vadd.f32 %v1483, %v1484
    %v1486 = vsel %vm1297, %v1438, 0.0
    %v1487 = vadd.f32 %v1485, %v1486
    %v1488 = vsel %vm1297, %v1440, 0.0
    %v1489 = vadd.f32 %v1487, %v1488
    %v1490 = vsel %vm1297, %v1442, 0.0
    %v1491 = vadd.f32 %v1489, %v1490
    %v1492 = vsel %vm1297, %v1444, 0.0
    %v1493 = vadd.f32 %v1491, %v1492
    %v1494 = vsel %vm1297, %v1446, 0.0
    %v1495 = vadd.f32 %v1493, %v1494
    %v1496 = vsel %vm1297, %v1448, 0.0
    %v1497 = vadd.f32 %v1495, %v1496
    %v1498 = vsel %vm1297, %v1450, 0.0
    %v1499 = vadd.f32 %v1497, %v1498
    %v1500 = vsel %vm1297, %v1452, 0.0
    %v1501 = vadd.f32 %v1499, %v1500
    %v1502 = vsel %vm1297, %v1454, 0.0
    %v1503 = vadd.f32 %v1501, %v1502
    %v1504 = vsel %vm1297, %v1456, 0.0
    %v1505 = vadd.f32 %v1503, %v1504
    %v1506 = vsel %vm1297, %v1458, 0.0
    %v1507 = vadd.f32 %v1505, %v1506
    %v1508 = vrot.slane %v1507, 4
    %v1509 = vadd.f32 %v1507, %v1508
    %v1510 = vrot.slane %v1509, 2
    %v1511 = vadd.f32 %v1509, %v1510
    %v1512 = vrot.slane %v1511, 1
    %v1513 = vadd.f32 %v1511, %v1512
    %v1514 = vrcp.pop 30.0
    %v1515 = vmul.f32 %v1393, %v1514
    %v1516 = vmul.f32 %v1428, %v1514
    %v1517 = vmul.f32 %v1478, %v1514
    %v1518 = vmul.f32 %v1513, %v1514
    %v1519 = vmul.f32 %v1515, %v1515
    %v1520 = vmul.f32 %v1516, %v1516
    %v1521 = vsub.f32 %v1517, %v1519
    %v1522 = vsub.f32 %v1518, %v1520
    %v1523 = vmax.f32 %v1521, 0.0
    %v1524 = vmax.f32 %v1522, 0.0
    %v1525 = vsub.f32 %v635, %v1515
    %v1526 = vsub.f32 %v637, %v1516
    %v1527 = vsub.f32 %v1224, %v1515
    %v1528 = vsub.f32 %v1225, %v1516
    %v1529 = vsub.f32 %v1237, %v1515
    %v1530 = vsub.f32 %v1238, %v1516
    %v1531 = vsub.f32 %v1249, %v1515
    %v1532 = vsub.f32 %v1250, %v1516
    %v1533 = vsub.f32 %v1262, %v1515
    %v1534 = vsub.f32 %v1263, %v1516
    %v1535 = vsub.f32 %v1275, %v1515
    %v1536 = vsub.f32 %v1276, %v1516
    %v1537 = vsub.f32 %v1288, %v1515
    %v1538 = vsub.f32 %v1289, %v1516
    %v1539 = vsub.f32 %v1298, %v1515
    %v1540 = vsub.f32 %v1296, %v1516
    %v1541 = vsub.f32 %v924, %v1515
    %v1542 = vsub.f32 %v963, %v1516
    %v1543 = vsub.f32 %v1310, %v1515
    %v1544 = vsub.f32 %v1311, %v1516
    %v1545 = vsub.f32 %v1322, %v1515
    %v1546 = vsub.f32 %v1323, %v1516
    %v1547 = vsub.f32 %v1334, %v1515
    %v1548 = vsub.f32 %v1335, %v1516
    %v1549 = vsub.f32 %v1346, %v1515
    %v1550 = vsub.f32 %v1347, %v1516
    %v1551 = vsub.f32 %v1358, %v1515
    %v1552 = vsub.f32 %v1359, %v1516
    %v1553 = vsub.f32 %v1370, %v1515
    %v1554 = vsub.f32 %v1371, %v1516
    %v1555 = vadd.f32 %v1523, 1e-05
    %v1556 = vadd.f32 %v1524, 1e-05
    %v1557 = vrsqrt.pop %v1555
    %v1558 = vrsqrt.pop %v1556
    %v1559 = vmul.f32 %v1525, %v1557
    %v1560 = vmul.f32 %v1526, %v1558
    %v1561 = vmul.f32 %v1527, %v1557
    %v1562 = vmul.f32 %v1528, %v1558
    %v1563 = vmul.f32 %v1529, %v1557
    %v1564 = vmul.f32 %v1530, %v1558
    %v1565 = vmul.f32 %v1531, %v1557
    %v1566 = vmul.f32 %v1532, %v1558
    %v1567 = vmul.f32 %v1533, %v1557
    %v1568 = vmul.f32 %v1534, %v1558
    %v1569 = vmul.f32 %v1535, %v1557
    %v1570 = vmul.f32 %v1536, %v1558
    %v1571 = vmul.f32 %v1537, %v1557
    %v1572 = vmul.f32 %v1538, %v1558
    %v1573 = vmul.f32 %v1539, %v1557
    %v1574 = vmul.f32 %v1540, %v1558
    %v1575 = vmul.f32 %v1541, %v1557
    %v1576 = vmul.f32 %v1542, %v1558
    %v1577 = vmul.f32 %v1543, %v1557
    %v1578 = vmul.f32 %v1544, %v1558
    %v1579 = vmul.f32 %v1545, %v1557
    %v1580 = vmul.f32 %v1546, %v1558
    %v1581 = vmul.f32 %v1547, %v1557
    %v1582 = vmul.f32 %v1548, %v1558
    %v1583 = vmul.f32 %v1549, %v1557
    %v1584 = vmul.f32 %v1550, %v1558
    %v1585 = vmul.f32 %v1551, %v1557
    %v1586 = vmul.f32 %v1552, %v1558
    %v1587 = vmul.f32 %v1553, %v1557
    %v1588 = vmul.f32 %v1554, %v1558
    %v1589 = vld [vmem:[%s3] sm:$0x3]
    %v1591 = vlaneseq
    %v1592 = vshrl.u32 %v1591, 7
    %v1593 = vsub.s32 0, %v1592
    %v1594 = vrot.slane %v1589, %v1593
    %v1595 = vlaneseq
    %v1596 = vshrl.u32 %v1595, 7
    %v1597 = vsub.s32 1, %v1596
    %v1598 = vrot.slane %v1589, %v1597
    %v1601 = vmul.f32 %v1559, %v1594
    %v1602 = vmul.f32 %v1560, %v1598
    %v1603 = vmul.f32 %v1561, %v1594
    %v1604 = vmul.f32 %v1562, %v1598
    %v1605 = vmul.f32 %v1563, %v1594
    %v1606 = vmul.f32 %v1564, %v1598
    %v1607 = vmul.f32 %v1565, %v1594
    %v1608 = vmul.f32 %v1566, %v1598
    %v1609 = vmul.f32 %v1567, %v1594
    %v1610 = vmul.f32 %v1568, %v1598
    %v1611 = vmul.f32 %v1569, %v1594
    %v1612 = vmul.f32 %v1570, %v1598
    %v1613 = vmul.f32 %v1571, %v1594
    %v1614 = vmul.f32 %v1572, %v1598
    %v1615 = vmul.f32 %v1573, %v1594
    %v1616 = vmul.f32 %v1574, %v1598
    %v1617 = vmul.f32 %v1575, %v1594
    %v1618 = vmul.f32 %v1576, %v1598
    %v1619 = vmul.f32 %v1577, %v1594
    %v1620 = vmul.f32 %v1578, %v1598
    %v1621 = vmul.f32 %v1579, %v1594
    %v1622 = vmul.f32 %v1580, %v1598
    %v1623 = vmul.f32 %v1581, %v1594
    %v1624 = vmul.f32 %v1582, %v1598
    %v1625 = vmul.f32 %v1583, %v1594
    %v1626 = vmul.f32 %v1584, %v1598
    %v1627 = vmul.f32 %v1585, %v1594
    %v1628 = vmul.f32 %v1586, %v1598
    %v1629 = vmul.f32 %v1587, %v1594
    %v1630 = vmul.f32 %v1588, %v1598
    %v1631 = vld [vmem:[%s4] sm:$0x3]
    %v1633 = vlaneseq
    %v1634 = vshrl.u32 %v1633, 7
    %v1635 = vsub.s32 0, %v1634
    %v1636 = vrot.slane %v1631, %v1635
    %v1637 = vlaneseq
    %v1638 = vshrl.u32 %v1637, 7
    %v1639 = vsub.s32 1, %v1638
    %v1640 = vrot.slane %v1631, %v1639
    %v1643 = vadd.f32 %v1601, %v1636
    %v1644 = vadd.f32 %v1602, %v1640
    %v1645 = vadd.f32 %v1603, %v1636
    %v1646 = vadd.f32 %v1604, %v1640
    %v1647 = vadd.f32 %v1605, %v1636
    %v1648 = vadd.f32 %v1606, %v1640
    %v1649 = vadd.f32 %v1607, %v1636
    %v1650 = vadd.f32 %v1608, %v1640
    %v1651 = vadd.f32 %v1609, %v1636
    %v1652 = vadd.f32 %v1610, %v1640
    %v1653 = vadd.f32 %v1611, %v1636
    %v1654 = vadd.f32 %v1612, %v1640
    %v1655 = vadd.f32 %v1613, %v1636
    %v1656 = vadd.f32 %v1614, %v1640
    %v1657 = vadd.f32 %v1615, %v1636
    %v1658 = vadd.f32 %v1616, %v1640
    %v1659 = vadd.f32 %v1617, %v1636
    %v1660 = vadd.f32 %v1618, %v1640
    %v1661 = vadd.f32 %v1619, %v1636
    %v1662 = vadd.f32 %v1620, %v1640
    %v1663 = vadd.f32 %v1621, %v1636
    %v1664 = vadd.f32 %v1622, %v1640
    %v1665 = vadd.f32 %v1623, %v1636
    %v1666 = vadd.f32 %v1624, %v1640
    %v1667 = vadd.f32 %v1625, %v1636
    %v1668 = vadd.f32 %v1626, %v1640
    %v1669 = vadd.f32 %v1627, %v1636
    %v1670 = vadd.f32 %v1628, %v1640
    %v1671 = vadd.f32 %v1629, %v1636
    %v1672 = vadd.f32 %v1630, %v1640
    %v1673 = vmax.f32 %v1643, 0.0
    %v1674 = vmax.f32 %v1644, 0.0
    %v1675 = vmax.f32 %v1645, 0.0
    %v1676 = vmax.f32 %v1646, 0.0
    %v1677 = vmax.f32 %v1647, 0.0
    %v1678 = vmax.f32 %v1648, 0.0
    %v1679 = vmax.f32 %v1649, 0.0
    %v1680 = vmax.f32 %v1650, 0.0
    %v1681 = vmax.f32 %v1651, 0.0
    %v1682 = vmax.f32 %v1652, 0.0
    %v1683 = vmax.f32 %v1653, 0.0
    %v1684 = vmax.f32 %v1654, 0.0
    %v1685 = vmax.f32 %v1655, 0.0
    %v1686 = vmax.f32 %v1656, 0.0
    %v1687 = vmax.f32 %v1657, 0.0
    %v1688 = vmax.f32 %v1658, 0.0
    %v1689 = vmax.f32 %v1659, 0.0
    %v1690 = vmax.f32 %v1660, 0.0
    %v1691 = vmax.f32 %v1661, 0.0
    %v1692 = vmax.f32 %v1662, 0.0
    %v1693 = vmax.f32 %v1663, 0.0
    %v1694 = vmax.f32 %v1664, 0.0
    %v1695 = vmax.f32 %v1665, 0.0
    %v1696 = vmax.f32 %v1666, 0.0
    %v1697 = vmax.f32 %v1667, 0.0
    %v1698 = vmax.f32 %v1668, 0.0
    %v1699 = vmax.f32 %v1669, 0.0
    %v1700 = vmax.f32 %v1670, 0.0
    %v1701 = vmax.f32 %v1671, 0.0
    %v1702 = vmax.f32 %v1672, 0.0
    %v1703 = vpack.c.bf16 %v1675, %v1673
    %v1704 = vpack.c.bf16 %v1676, %v1674
    %v1705 = vpack.c.bf16 %v1679, %v1677
    %v1706 = vpack.c.bf16 %v1680, %v1678
    %v1707 = vpack.c.bf16 %v1683, %v1681
    %v1708 = vpack.c.bf16 %v1684, %v1682
    %v1709 = vpack.c.bf16 %v1687, %v1685
    %v1710 = vpack.c.bf16 %v1688, %v1686
    %v1711 = vpack.c.bf16 %v1691, %v1689
    %v1712 = vpack.c.bf16 %v1692, %v1690
    %v1713 = vpack.c.bf16 %v1695, %v1693
    %v1714 = vpack.c.bf16 %v1696, %v1694
    %v1715 = vpack.c.bf16 %v1699, %v1697
    %v1716 = vpack.c.bf16 %v1700, %v1698
    %v1717 = vpack.c.bf16 %v1701, %v1701
    %v1718 = vpack.c.bf16 %v1702, %v1702
    %v1719 = vlaneseq
    %v1720 = vshrl.u32 %v1719, 7
    %vm1721 = vcmp.lt.s32.totalorder %v1720, 2
    %v1722 = vsel %vm1721, 1, 0
    %v1723 = vcvt.s32.f32 %v1722
    %v1724 = vld [vmem:[%s2] sm:$0xf]
    %v1725 = vld [vmem:[%s2 + $0x4] sm:$0xf]
    %v1726 = vld [vmem:[%s2 + $0x8] sm:$0xf]
    %v1727 = vld [vmem:[%s2 + $0xc] sm:$0xf]
    %v1728 = vld [vmem:[%s2 + $0x10] sm:$0xf]
    %v1729 = vld [vmem:[%s2 + $0x14] sm:$0xf]
    %v1730 = vld [vmem:[%s2 + $0x18] sm:$0xf]
    %v1731 = vld [vmem:[%s2 + $0x1c] sm:$0xf]
    %v1732 = vld [vmem:[%s2 + $0x20] sm:$0xf]
    %v1733 = vld [vmem:[%s2 + $0x24] sm:$0xf]
    %v1744 = vunpack.c.l.b16 %v1724
    %v1745 = vunpack.c.l.b16 %v1725
    %v1746 = vunpack.c.l.b16 %v1726
    %v1747 = vunpack.c.l.b16 %v1727
    %v1748 = vunpack.c.l.b16 %v1728
    %v1749 = vunpack.c.l.b16 %v1729
    %v1750 = vunpack.c.l.b16 %v1730
    %v1751 = vunpack.c.l.b16 %v1731
    %v1752 = vunpack.c.l.b16 %v1732
    %v1753 = vunpack.c.l.b16 %v1733
    %v1754 = vpack.c.b16 %v1745, %v1744
    %v1755 = vpack.c.b16 %v1747, %v1746
    %v1756 = vpack.c.b16 %v1749, %v1748
    %v1757 = vpack.c.b16 %v1751, %v1750
    %v1758 = vpack.c.b16 %v1753, %v1752
    %v1765 = vsel %vm1274, %v1703, 0
    %v1768 = vsel %vm1274, %v1705, 0
    %v1771 = vsel %vm1274, %v1707, 0
    %v1774 = vsel %vm1274, %v1709, 0
    %v1777 = vsel %vm1274, %v1711, 0
    %v1780 = vsel %vm1274, %v1713, 0
    %v1783 = vsel %vm1274, %v1715, 0
    %v1786 = vsel %vm1274, %v1717, 0
    %1788 = vmatprep.subr.bf16.mxu0 0
    %1789 = vmatpush1.bf16.msra.mxu0 %v1754
    %1790 = vmatprep.subr.bf16.mxu0 0
    %1791 = vmatpush1.bf16.msra.mxu0 %v1755
    %1792 = vmatprep.subr.bf16.mxu0 0
    %1793 = vmatpush1.bf16.msra.mxu0 %v1756
    %1794 = vmatprep.subr.bf16.mxu0 0
    %1795 = vmatpush1.bf16.msra.mxu0 %v1757
    %1796 = vmatprep.subr.bf16.mxu0 0
    %1797 = vmatpush1.bf16.msra.mxu0 %v1758
    %1798 = vmatprep.subr.bf16.mxu0 0
    %1799 = vmatpush1.bf16.msra.mxu0 0
    %1800 = vmatprep.subr.bf16.mxu0 0
    %1801 = vmatpush1.bf16.msra.mxu0 0
    %1802 = vmatprep.subr.bf16.mxu0 0
    %1803 = vmatpush1.bf16.msra.mxu0 0
    %1804 = vmatprep.subr.bf16.mxu0 0
    %1805 = vmatpush1.bf16.msra.mxu0 0
    %1806 = vmatprep.subr.bf16.mxu0 0
    %1807 = vmatpush1.bf16.msra.mxu0 0
    %1808 = vmatprep.subr.bf16.mxu0 0
    %1809 = vmatpush1.bf16.msra.mxu0 0
    %1810 = vmatprep.subr.bf16.mxu0 0
    %1811 = vmatpush1.bf16.msra.mxu0 0
    %1812 = vmatprep.subr.bf16.mxu0 0
    %1813 = vmatpush1.bf16.msra.mxu0 0
    %1814 = vmatprep.subr.bf16.mxu0 0
    %1815 = vmatpush1.bf16.msra.mxu0 0
    %1816 = vmatprep.subr.bf16.mxu0 0
    %1817 = vmatpush1.bf16.msra.mxu0 0
    %1818 = vmatprep.subr.bf16.mxu0 0
    %1819 = vmatpush1.bf16.msra.mxu0 0
    %1820 = vmatprep.mubr.bf16.mxu0 0
    %1821 = vmatmul.mubr.bf16.gmra.mrb[0].mxu0 %v1765
    %v1822 = vpop.f32.mrb[0].mxu0
    %v1823 = vadd.f32 0.0, %v1822
    %v1824 = vpop.f32.mrb[0].mxu0
    %v1825 = vpop.f32.mrb[0].mxu0
    %v1826 = vadd.f32 0.0, %v1825
    %v1827 = vpop.f32.mrb[0].mxu0
    %1828 = vmatprep.mubr.bf16.mxu0 0
    %1829 = vmatmul.mubr.bf16.gmra.mrb[0].mxu0 %v1768
    %v1830 = vpop.f32.mrb[0].mxu0
    %v1831 = vadd.f32 0.0, %v1830
    %v1832 = vpop.f32.mrb[0].mxu0
    %v1833 = vpop.f32.mrb[0].mxu0
    %v1834 = vadd.f32 0.0, %v1833
    %v1835 = vpop.f32.mrb[0].mxu0
    %1836 = vmatprep.mubr.bf16.mxu0 0
    %1837 = vmatmul.mubr.bf16.gmra.mrb[0].mxu0 %v1771
    %v1838 = vpop.f32.mrb[0].mxu0
    %v1839 = vadd.f32 0.0, %v1838
    %v1840 = vpop.f32.mrb[0].mxu0
    %v1841 = vpop.f32.mrb[0].mxu0
    %v1842 = vadd.f32 0.0, %v1841
    %v1843 = vpop.f32.mrb[0].mxu0
    %1844 = vmatprep.mubr.bf16.mxu0 0
    %1845 = vmatmul.mubr.bf16.gmra.mrb[0].mxu0 %v1774
    %v1846 = vpop.f32.mrb[0].mxu0
    %v1847 = vadd.f32 0.0, %v1846
    %v1848 = vpop.f32.mrb[0].mxu0
    %v1849 = vpop.f32.mrb[0].mxu0
    %v1850 = vadd.f32 0.0, %v1849
    %v1851 = vpop.f32.mrb[0].mxu0
    %1852 = vmatprep.mubr.bf16.mxu0 0
    %1853 = vmatmul.mubr.bf16.gmra.mrb[0].mxu0 %v1777
    %v1854 = vpop.f32.mrb[0].mxu0
    %v1855 = vadd.f32 0.0, %v1854
    %v1856 = vpop.f32.mrb[0].mxu0
    %v1857 = vpop.f32.mrb[0].mxu0
    %v1858 = vadd.f32 0.0, %v1857
    %v1859 = vpop.f32.mrb[0].mxu0
    %1860 = vmatprep.mubr.bf16.mxu0 0
    %1861 = vmatmul.mubr.bf16.gmra.mrb[0].mxu0 %v1780
    %v1862 = vpop.f32.mrb[0].mxu0
    %v1863 = vadd.f32 0.0, %v1862
    %v1864 = vpop.f32.mrb[0].mxu0
    %v1865 = vpop.f32.mrb[0].mxu0
    %v1866 = vadd.f32 0.0, %v1865
    %v1867 = vpop.f32.mrb[0].mxu0
    %1868 = vmatprep.mubr.bf16.mxu0 0
    %1869 = vmatmul.mubr.bf16.gmra.mrb[0].mxu0 %v1783
    %v1870 = vpop.f32.mrb[0].mxu0
    %v1871 = vadd.f32 0.0, %v1870
    %v1872 = vpop.f32.mrb[0].mxu0
    %v1873 = vpop.f32.mrb[0].mxu0
    %v1874 = vadd.f32 0.0, %v1873
    %v1875 = vpop.f32.mrb[0].mxu0
    %1876 = vmatprep.mubr.bf16.mxu0 0
    %1877 = vmatmul.mubr.bf16.gmra.mrb[0].mxu0 %v1786
    %v1878 = vpop.f32.mrb[0].mxu0
    %v1879 = vadd.f32 0.0, %v1878
    %v1880 = vpop.f32.mrb[0].mxu0
    %v1881 = vpop.f32.mrb[0].mxu0
    %v1882 = vpop.f32.mrb[0].mxu0
    %1883 = vdwg.mxu0
    %1885 = vrot.lane.b32.xlu0 %v1826, 16
    %v1886 = vpop.permute.xlu0 %1885
    %1889 = vrot.lane.b32.xlu0 %v1831, 32
    %v1890 = vpop.permute.xlu0 %1889
    %1893 = vrot.lane.b32.xlu0 %v1834, 48
    %v1894 = vpop.permute.xlu0 %1893
    %1897 = vrot.lane.b32.xlu0 %v1839, 64
    %v1898 = vpop.permute.xlu0 %1897
    %1901 = vrot.lane.b32.xlu0 %v1842, 80
    %v1902 = vpop.permute.xlu0 %1901
    %1905 = vrot.lane.b32.xlu0 %v1847, 96
    %v1906 = vpop.permute.xlu0 %1905
    %1909 = vrot.lane.b32.xlu0 %v1850, 112
    %v1910 = vpop.permute.xlu0 %1909
    %1913 = vrot.lane.b32.xlu0 %v1858, 16
    %v1914 = vpop.permute.xlu0 %1913
    %1917 = vrot.lane.b32.xlu0 %v1863, 32
    %v1918 = vpop.permute.xlu0 %1917
    %1921 = vrot.lane.b32.xlu0 %v1866, 48
    %v1922 = vpop.permute.xlu0 %1921
    %1925 = vrot.lane.b32.xlu0 %v1871, 64
    %v1926 = vpop.permute.xlu0 %1925
    %1929 = vrot.lane.b32.xlu0 %v1874, 80
    %v1930 = vpop.permute.xlu0 %1929
    %1933 = vrot.lane.b32.xlu0 %v1879, 96
    %v1934 = vpop.permute.xlu0 %1933
    %v1936 = vsel %vm1223, %v1823, %v1886
    %v1937 = vsel %vm1236, %v1936, %v1890
    %v1938 = vsel %vm596, %v1937, %v1894
    %v1939 = vsel %vm1261, %v1938, %v1898
    %v1940 = vsel %vm1274, %v1939, %v1902
    %v1941 = vsel %vm1287, %v1940, %v1906
    %v1942 = vsel %vm1297, %v1941, %v1910
    %v1943 = vsel %vm1223, %v1855, %v1914
    %v1944 = vsel %vm1236, %v1943, %v1918
    %v1945 = vsel %vm596, %v1944, %v1922
    %v1946 = vsel %vm1261, %v1945, %v1926
    %v1947 = vsel %vm1274, %v1946, %v1930
    %v1948 = vsel %vm1287, %v1947, %v1934
    %1950 = vrot.lane.b32.xlu0 %v1823, 112
    %v1951 = vpop.permute.xlu0 %1950
    %1953 = vrot.lane.b32.xlu0 %v1831, 16
    %v1954 = vpop.permute.xlu0 %1953
    %1956 = vrot.lane.b32.xlu0 %v1834, 32
    %v1957 = vpop.permute.xlu0 %1956
    %1959 = vrot.lane.b32.xlu0 %v1839, 48
    %v1960 = vpop.permute.xlu0 %1959
    %1962 = vrot.lane.b32.xlu0 %v1842, 64
    %v1963 = vpop.permute.xlu0 %1962
    %1965 = vrot.lane.b32.xlu0 %v1847, 80
    %v1966 = vpop.permute.xlu0 %1965
    %1968 = vrot.lane.b32.xlu0 %v1850, 96
    %v1969 = vpop.permute.xlu0 %1968
    %1972 = vrot.lane.b32.xlu0 %v1855, 112
    %v1973 = vpop.permute.xlu0 %1972
    %1975 = vrot.lane.b32.xlu0 %v1863, 16
    %v1976 = vpop.permute.xlu0 %1975
    %1978 = vrot.lane.b32.xlu0 %v1866, 32
    %v1979 = vpop.permute.xlu0 %1978
    %1981 = vrot.lane.b32.xlu0 %v1871, 48
    %v1982 = vpop.permute.xlu0 %1981
    %1984 = vrot.lane.b32.xlu0 %v1874, 64
    %v1985 = vpop.permute.xlu0 %1984
    %1987 = vrot.lane.b32.xlu0 %v1879, 80
    %v1988 = vpop.permute.xlu0 %1987
    %v1990 = vsel %vm1223, %v1951, %v1826
    %v1991 = vsel %vm1236, %v1990, %v1954
    %v1992 = vsel %vm596, %v1991, %v1957
    %v1993 = vsel %vm1261, %v1992, %v1960
    %v1994 = vsel %vm1274, %v1993, %v1963
    %v1995 = vsel %vm1287, %v1994, %v1966
    %v1996 = vsel %vm1297, %v1995, %v1969
    %v1997 = vsel %vm1223, %v1973, %v1858
    %v1998 = vsel %vm1236, %v1997, %v1976
    %v1999 = vsel %vm596, %v1998, %v1979
    %v2000 = vsel %vm1261, %v1999, %v1982
    %v2001 = vsel %vm1274, %v2000, %v1985
    %v2002 = vsel %vm1287, %v2001, %v1988
    %v2003 = vsel %vm1297, %v1948, 0.0
    %2006 = vrot.lane.b32.xlu0 %v1996, 16
    %v2007 = vpop.permute.xlu0 %2006
    %2008 = vrot.lane.b32.xlu0 %v2002, 16
    %v2009 = vpop.permute.xlu0 %2008
    %v2010 = vsel %vm1223, %v2007, %v2009
    %v2013 = vsel %vm1223, 0.0, %v2007
    %v2014 = vadd.f32 %v1942, %v2013
    %v2015 = vadd.f32 %v2003, %v2010
    %v2016 = vmul.f32 %v2014, %v1723
    %v2017 = vmul.f32 %v2015, %v1723
    %v2018 = vadd.f32 %v2016, %v2017
    %2019 = vadd.xlane.f32.xlu0 %v2018
    %v2020 = vpop.xlane.xlu0 %2019
    %v2021 = vrot.slane %v2020, 4
    %v2022 = vadd.f32 %v2020, %v2021
    %v2023 = vrot.slane %v2022, 2
    %v2024 = vadd.f32 %v2022, %v2023
    %v2025 = vrot.slane %v2024, 1
    %v2026 = vadd.f32 %v2024, %v2025
    %s2027 = vtos %v2026
    %v2028 = vrcp.pop 512.0
    %s2029 = vtos %v2028
    %s2030 = smul.f32 %s2027, %s2029
    %v2031 = vstv %s2030
    %v2032 = vsub.f32 %v2014, %v2031
    %v2033 = vsub.f32 %v2015, %v2031
    %v2034 = vmul.f32 %v2032, %v1723
    %v2035 = vmul.f32 %v2033, %v1723
    %v2036 = vmul.f32 %v2034, %v2034
    %v2037 = vmul.f32 %v2035, %v2035
    %v2038 = vadd.f32 %v2036, %v2037
    %2039 = vadd.xlane.f32.xlu0 %v2038
    %v2040 = vpop.xlane.xlu0 %2039
    %v2041 = vrot.slane %v2040, 4
    %v2042 = vadd.f32 %v2040, %v2041
    %v2043 = vrot.slane %v2042, 2
    %v2044 = vadd.f32 %v2042, %v2043
    %v2045 = vrot.slane %v2044, 1
    %v2046 = vadd.f32 %v2044, %v2045
    %s2047 = vtos %v2046
    %v2048 = vrcp.pop 512.0
    %s2049 = vtos %v2048
    %s2050 = smul.f32 %s2047, %s2049
    %s2051 = sadd.f32 %s2050, 1e-05
    %v2052 = vstv %s2051
    %v2053 = vrsqrt.pop %v2052
    %s2054 = vtos %v2053
    %v2055 = vstv %s2054
    %v2056 = vmul.f32 %v2032, %v2055
    %v2057 = vmul.f32 %v2033, %v2055
    %s2058 = sld [smem:[#allocation6]]
    %v2059 = vstv %s2058
    %v2060 = vmul.f32 %v2056, %v2059
    %v2061 = vmul.f32 %v2057, %v2059
    %s2062 = sld [smem:[#allocation7]]
    %v2063 = vstv %s2062
    %v2064 = vadd.f32 %v2060, %v2063
    %v2065 = vadd.f32 %v2061, %v2063
    %2066 = vst [vmem:[#allocation9] sm:$0xff] %v2064
    %2067 = vst [vmem:[#allocation9 + $0x8] sm:$0xff] %v2065
    %v2068 = vld [vmem:[%s2 + $0x28] sm:$0xf]
    %v2069 = vld [vmem:[%s2 + $0x2c] sm:$0xf]
    %v2070 = vld [vmem:[%s2 + $0x30] sm:$0xf]
    %v2071 = vld [vmem:[%s2 + $0x34] sm:$0xf]
    %v2072 = vld [vmem:[%s2 + $0x38] sm:$0xf]
    %v2073 = vld [vmem:[%s2 + $0x3c] sm:$0xf]
    %v2074 = vld [vmem:[%s2 + $0x40] sm:$0xf]
    %v2075 = vld [vmem:[%s2 + $0x44] sm:$0xf]
    %v2076 = vld [vmem:[%s2 + $0x48] sm:$0xf]
    %v2077 = vld [vmem:[%s2 + $0x4c] sm:$0xf]
    %2094 = vrot.lane.b32.xlu0 %v1703, 48
    %v2095 = vpop.permute.xlu0 %2094
    %2096 = vrot.lane.b32.xlu0 %v1704, 48
    %v2097 = vpop.permute.xlu0 %2096
    %2098 = vrot.lane.b32.xlu0 %v1705, 48
    %v2099 = vpop.permute.xlu0 %2098
    %2100 = vrot.lane.b32.xlu0 %v1706, 48
    %v2101 = vpop.permute.xlu0 %2100
    %2102 = vrot.lane.b32.xlu0 %v1707, 48
    %v2103 = vpop.permute.xlu0 %2102
    %2104 = vrot.lane.b32.xlu0 %v1708, 48
    %v2105 = vpop.permute.xlu0 %2104
    %2106 = vrot.lane.b32.xlu0 %v1709, 48
    %v2107 = vpop.permute.xlu0 %2106
    %2108 = vrot.lane.b32.xlu0 %v1710, 48
    %v2109 = vpop.permute.xlu0 %2108
    %2110 = vrot.lane.b32.xlu0 %v1711, 48
    %v2111 = vpop.permute.xlu0 %2110
    %2112 = vrot.lane.b32.xlu0 %v1712, 48
    %v2113 = vpop.permute.xlu0 %2112
    %2114 = vrot.lane.b32.xlu0 %v1713, 48
    %v2115 = vpop.permute.xlu0 %2114
    %2116 = vrot.lane.b32.xlu0 %v1714, 48
    %v2117 = vpop.permute.xlu0 %2116
    %2118 = vrot.lane.b32.xlu0 %v1715, 48
    %v2119 = vpop.permute.xlu0 %2118
    %2120 = vrot.lane.b32.xlu0 %v1716, 48
    %v2121 = vpop.permute.xlu0 %2120
    %2122 = vrot.lane.b32.xlu0 %v1717, 48
    %v2123 = vpop.permute.xlu0 %2122
    %2124 = vrot.lane.b32.xlu0 %v1718, 48
    %v2125 = vpop.permute.xlu0 %2124
    %vm2126 = vcmask 392192
    %v2127 = vsel %vm2126, %v2095, %v2097
    %v2128 = vsel %vm2126, %v2099, %v2101
    %v2129 = vsel %vm2126, %v2103, %v2105
    %v2130 = vsel %vm2126, %v2107, %v2109
    %v2131 = vsel %vm2126, %v2111, %v2113
    %v2132 = vsel %vm2126, %v2115, %v2117
    %v2133 = vsel %vm2126, %v2119, %v2121
    %v2134 = vsel %vm2126, %v2123, %v2125
    %v2145 = vunpack.c.l.b16 %v2068
    %v2146 = vunpack.c.l.b16 %v2069
    %v2147 = vunpack.c.l.b16 %v2070
    %v2148 = vunpack.c.l.b16 %v2071
    %v2149 = vunpack.c.l.b16 %v2072
    %v2150 = vunpack.c.l.b16 %v2073
    %v2151 = vunpack.c.l.b16 %v2074
    %v2152 = vunpack.c.l.b16 %v2075
    %v2153 = vunpack.c.l.b16 %v2076
    %v2154 = vunpack.c.l.b16 %v2077
    %v2155 = vpack.c.b16 %v2146, %v2145
    %v2156 = vpack.c.b16 %v2148, %v2147
    %v2157 = vpack.c.b16 %v2150, %v2149
    %v2158 = vpack.c.b16 %v2152, %v2151
    %v2159 = vpack.c.b16 %v2154, %v2153
    %v2166 = vsel %vm1274, %v2127, 0
    %v2169 = vsel %vm1274, %v2128, 0
    %v2172 = vsel %vm1274, %v2129, 0
    %v2175 = vsel %vm1274, %v2130, 0
    %v2178 = vsel %vm1274, %v2131, 0
    %v2181 = vsel %vm1274, %v2132, 0
    %v2184 = vsel %vm1274, %v2133, 0
    %v2187 = vsel %vm1274, %v2134, 0
    %2189 = vmatprep.subr.bf16.mxu0 0
    %2190 = vmatpush1.bf16.msra.mxu0 %v2155
    %2191 = vmatprep.subr.bf16.mxu0 0
    %2192 = vmatpush1.bf16.msra.mxu0 %v2156
    %2193 = vmatprep.subr.bf16.mxu0 0
    %2194 = vmatpush1.bf16.msra.mxu0 %v2157
    %2195 = vmatprep.subr.bf16.mxu0 0
    %2196 = vmatpush1.bf16.msra.mxu0 %v2158
    %2197 = vmatprep.subr.bf16.mxu0 0
    %2198 = vmatpush1.bf16.msra.mxu0 %v2159
    %2199 = vmatprep.subr.bf16.mxu0 0
    %2200 = vmatpush1.bf16.msra.mxu0 0
    %2201 = vmatprep.subr.bf16.mxu0 0
    %2202 = vmatpush1.bf16.msra.mxu0 0
    %2203 = vmatprep.subr.bf16.mxu0 0
    %2204 = vmatpush1.bf16.msra.mxu0 0
    %2205 = vmatprep.subr.bf16.mxu0 0
    %2206 = vmatpush1.bf16.msra.mxu0 0
    %2207 = vmatprep.subr.bf16.mxu0 0
    %2208 = vmatpush1.bf16.msra.mxu0 0
    %2209 = vmatprep.subr.bf16.mxu0 0
    %2210 = vmatpush1.bf16.msra.mxu0 0
    %2211 = vmatprep.subr.bf16.mxu0 0
    %2212 = vmatpush1.bf16.msra.mxu0 0
    %2213 = vmatprep.subr.bf16.mxu0 0
    %2214 = vmatpush1.bf16.msra.mxu0 0
    %2215 = vmatprep.subr.bf16.mxu0 0
    %2216 = vmatpush1.bf16.msra.mxu0 0
    %2217 = vmatprep.subr.bf16.mxu0 0
    %2218 = vmatpush1.bf16.msra.mxu0 0
    %2219 = vmatprep.subr.bf16.mxu0 0
    %2220 = vmatpush1.bf16.msra.mxu0 0
    %2221 = vmatprep.mubr.bf16.mxu0 0
    %2222 = vmatmul.mubr.bf16.gmra.mrb[0].mxu0 %v2166
    %v2223 = vpop.f32.mrb[0].mxu0
    %v2224 = vadd.f32 0.0, %v2223
    %v2225 = vpop.f32.mrb[0].mxu0
    %v2226 = vpop.f32.mrb[0].mxu0
    %v2227 = vadd.f32 0.0, %v2226
    %v2228 = vpop.f32.mrb[0].mxu0
    %2229 = vmatprep.mubr.bf16.mxu0 0
    %2230 = vmatmul.mubr.bf16.gmra.mrb[0].mxu0 %v2169
    %v2231 = vpop.f32.mrb[0].mxu0
    %v2232 = vadd.f32 0.0, %v2231
    %v2233 = vpop.f32.mrb[0].mxu0
    %v2234 = vpop.f32.mrb[0].mxu0
    %v2235 = vadd.f32 0.0, %v2234
    %v2236 = vpop.f32.mrb[0].mxu0
    %2237 = vmatprep.mubr.bf16.mxu0 0
    %2238 = vmatmul.mubr.bf16.gmra.mrb[0].mxu0 %v2172
    %v2239 = vpop.f32.mrb[0].mxu0
    %v2240 = vadd.f32 0.0, %v2239
    %v2241 = vpop.f32.mrb[0].mxu0
    %v2242 = vpop.f32.mrb[0].mxu0
    %v2243 = vadd.f32 0.0, %v2242
    %v2244 = vpop.f32.mrb[0].mxu0
    %2245 = vmatprep.mubr.bf16.mxu0 0
    %2246 = vmatmul.mubr.bf16.gmra.mrb[0].mxu0 %v2175
    %v2247 = vpop.f32.mrb[0].mxu0
    %v2248 = vadd.f32 0.0, %v2247
    %v2249 = vpop.f32.mrb[0].mxu0
    %v2250 = vpop.f32.mrb[0].mxu0
    %v2251 = vadd.f32 0.0, %v2250
    %v2252 = vpop.f32.mrb[0].mxu0
    %2253 = vmatprep.mubr.bf16.mxu0 0
    %2254 = vmatmul.mubr.bf16.gmra.mrb[0].mxu0 %v2178
    %v2255 = vpop.f32.mrb[0].mxu0
    %v2256 = vadd.f32 0.0, %v2255
    %v2257 = vpop.f32.mrb[0].mxu0
    %v2258 = vpop.f32.mrb[0].mxu0
    %v2259 = vadd.f32 0.0, %v2258
    %v2260 = vpop.f32.mrb[0].mxu0
    %2261 = vmatprep.mubr.bf16.mxu0 0
    %2262 = vmatmul.mubr.bf16.gmra.mrb[0].mxu0 %v2181
    %v2263 = vpop.f32.mrb[0].mxu0
    %v2264 = vadd.f32 0.0, %v2263
    %v2265 = vpop.f32.mrb[0].mxu0
    %v2266 = vpop.f32.mrb[0].mxu0
    %v2267 = vadd.f32 0.0, %v2266
    %v2268 = vpop.f32.mrb[0].mxu0
    %2269 = vmatprep.mubr.bf16.mxu0 0
    %2270 = vmatmul.mubr.bf16.gmra.mrb[0].mxu0 %v2184
    %v2271 = vpop.f32.mrb[0].mxu0
    %v2272 = vadd.f32 0.0, %v2271
    %v2273 = vpop.f32.mrb[0].mxu0
    %v2274 = vpop.f32.mrb[0].mxu0
    %v2275 = vadd.f32 0.0, %v2274
    %v2276 = vpop.f32.mrb[0].mxu0
    %2277 = vmatprep.mubr.bf16.mxu0 0
    %2278 = vmatmul.mubr.bf16.gmra.mrb[0].mxu0 %v2187
    %v2279 = vpop.f32.mrb[0].mxu0
    %v2280 = vadd.f32 0.0, %v2279
    %v2281 = vpop.f32.mrb[0].mxu0
    %v2282 = vpop.f32.mrb[0].mxu0
    %v2283 = vpop.f32.mrb[0].mxu0
    %2284 = vdwg.mxu0
    %2286 = vrot.lane.b32.xlu0 %v2227, 16
    %v2287 = vpop.permute.xlu0 %2286
    %2290 = vrot.lane.b32.xlu0 %v2232, 32
    %v2291 = vpop.permute.xlu0 %2290
    %2294 = vrot.lane.b32.xlu0 %v2235, 48
    %v2295 = vpop.permute.xlu0 %2294
    %2298 = vrot.lane.b32.xlu0 %v2240, 64
    %v2299 = vpop.permute.xlu0 %2298
    %2302 = vrot.lane.b32.xlu0 %v2243, 80
    %v2303 = vpop.permute.xlu0 %2302
    %2306 = vrot.lane.b32.xlu0 %v2248, 96
    %v2307 = vpop.permute.xlu0 %2306
    %2310 = vrot.lane.b32.xlu0 %v2251, 112
    %v2311 = vpop.permute.xlu0 %2310
    %2314 = vrot.lane.b32.xlu0 %v2259, 16
    %v2315 = vpop.permute.xlu0 %2314
    %2318 = vrot.lane.b32.xlu0 %v2264, 32
    %v2319 = vpop.permute.xlu0 %2318
    %2322 = vrot.lane.b32.xlu0 %v2267, 48
    %v2323 = vpop.permute.xlu0 %2322
    %2326 = vrot.lane.b32.xlu0 %v2272, 64
    %v2327 = vpop.permute.xlu0 %2326
    %2330 = vrot.lane.b32.xlu0 %v2275, 80
    %v2331 = vpop.permute.xlu0 %2330
    %2334 = vrot.lane.b32.xlu0 %v2280, 96
    %v2335 = vpop.permute.xlu0 %2334
    %v2337 = vsel %vm1223, %v2224, %v2287
    %v2338 = vsel %vm1236, %v2337, %v2291
    %v2339 = vsel %vm596, %v2338, %v2295
    %v2340 = vsel %vm1261, %v2339, %v2299
    %v2341 = vsel %vm1274, %v2340, %v2303
    %v2342 = vsel %vm1287, %v2341, %v2307
    %v2343 = vsel %vm1297, %v2342, %v2311
    %v2344 = vsel %vm1223, %v2256, %v2315
    %v2345 = vsel %vm1236, %v2344, %v2319
    %v2346 = vsel %vm596, %v2345, %v2323
    %v2347 = vsel %vm1261, %v2346, %v2327
    %v2348 = vsel %vm1274, %v2347, %v2331
    %v2349 = vsel %vm1287, %v2348, %v2335
    %2351 = vrot.lane.b32.xlu0 %v2224, 112
    %v2352 = vpop.permute.xlu0 %2351
    %2354 = vrot.lane.b32.xlu0 %v2232, 16
    %v2355 = vpop.permute.xlu0 %2354
    %2357 = vrot.lane.b32.xlu0 %v2235, 32
    %v2358 = vpop.permute.xlu0 %2357
    %2360 = vrot.lane.b32.xlu0 %v2240, 48
    %v2361 = vpop.permute.xlu0 %2360
    %2363 = vrot.lane.b32.xlu0 %v2243, 64
    %v2364 = vpop.permute.xlu0 %2363
    %2366 = vrot.lane.b32.xlu0 %v2248, 80
    %v2367 = vpop.permute.xlu0 %2366
    %2369 = vrot.lane.b32.xlu0 %v2251, 96
    %v2370 = vpop.permute.xlu0 %2369
    %2373 = vrot.lane.b32.xlu0 %v2256, 112
    %v2374 = vpop.permute.xlu0 %2373
    %2376 = vrot.lane.b32.xlu0 %v2264, 16
    %v2377 = vpop.permute.xlu0 %2376
    %2379 = vrot.lane.b32.xlu0 %v2267, 32
    %v2380 = vpop.permute.xlu0 %2379
    %2382 = vrot.lane.b32.xlu0 %v2272, 48
    %v2383 = vpop.permute.xlu0 %2382
    %2385 = vrot.lane.b32.xlu0 %v2275, 64
    %v2386 = vpop.permute.xlu0 %2385
    %2388 = vrot.lane.b32.xlu0 %v2280, 80
    %v2389 = vpop.permute.xlu0 %2388
    %v2391 = vsel %vm1223, %v2352, %v2227
    %v2392 = vsel %vm1236, %v2391, %v2355
    %v2393 = vsel %vm596, %v2392, %v2358
    %v2394 = vsel %vm1261, %v2393, %v2361
    %v2395 = vsel %vm1274, %v2394, %v2364
    %v2396 = vsel %vm1287, %v2395, %v2367
    %v2397 = vsel %vm1297, %v2396, %v2370
    %v2398 = vsel %vm1223, %v2374, %v2259
    %v2399 = vsel %vm1236, %v2398, %v2377
    %v2400 = vsel %vm596, %v2399, %v2380
    %v2401 = vsel %vm1261, %v2400, %v2383
    %v2402 = vsel %vm1274, %v2401, %v2386
    %v2403 = vsel %vm1287, %v2402, %v2389
    %v2404 = vsel %vm1297, %v2349, 0.0
    %2407 = vrot.lane.b32.xlu0 %v2397, 16
    %v2408 = vpop.permute.xlu0 %2407
    %2409 = vrot.lane.b32.xlu0 %v2403, 16
    %v2410 = vpop.permute.xlu0 %2409
    %v2411 = vsel %vm1223, %v2408, %v2410
    %v2414 = vsel %vm1223, 0.0, %v2408
    %v2415 = vadd.f32 %v2343, %v2414
    %v2416 = vadd.f32 %v2404, %v2411
    %v2417 = vmul.f32 %v2415, %v1723
    %v2418 = vmul.f32 %v2416, %v1723
    %v2419 = vadd.f32 %v2417, %v2418
    %2420 = vadd.xlane.f32.xlu0 %v2419
    %v2421 = vpop.xlane.xlu0 %2420
    %v2422 = vrot.slane %v2421, 4
    %v2423 = vadd.f32 %v2421, %v2422
    %v2424 = vrot.slane %v2423, 2
    %v2425 = vadd.f32 %v2423, %v2424
    %v2426 = vrot.slane %v2425, 1
    %v2427 = vadd.f32 %v2425, %v2426
    %s2428 = vtos %v2427
    %v2429 = vrcp.pop 512.0
    %s2430 = vtos %v2429
    %s2431 = smul.f32 %s2428, %s2430
    %v2432 = vstv %s2431
    %v2433 = vsub.f32 %v2415, %v2432
    %v2434 = vsub.f32 %v2416, %v2432
    %v2435 = vmul.f32 %v2433, %v1723
    %v2436 = vmul.f32 %v2434, %v1723
    %v2437 = vmul.f32 %v2435, %v2435
    %v2438 = vmul.f32 %v2436, %v2436
    %v2439 = vadd.f32 %v2437, %v2438
    %2440 = vadd.xlane.f32.xlu0 %v2439
    %v2441 = vpop.xlane.xlu0 %2440
    %v2442 = vrot.slane %v2441, 4
    %v2443 = vadd.f32 %v2441, %v2442
    %v2444 = vrot.slane %v2443, 2
    %v2445 = vadd.f32 %v2443, %v2444
    %v2446 = vrot.slane %v2445, 1
    %v2447 = vadd.f32 %v2445, %v2446
    %s2448 = vtos %v2447
    %v2449 = vrcp.pop 512.0
    %s2450 = vtos %v2449
    %s2451 = smul.f32 %s2448, %s2450
    %s2452 = sadd.f32 %s2451, 1e-05
    %v2453 = vstv %s2452
    %v2454 = vrsqrt.pop %v2453
    %s2455 = vtos %v2454
    %v2456 = vstv %s2455
    %v2457 = vmul.f32 %v2433, %v2456
    %v2458 = vmul.f32 %v2434, %v2456
    %s2459 = sld [smem:[#allocation6 + $0x1]]
    %v2460 = vstv %s2459
    %v2461 = vmul.f32 %v2457, %v2460
    %v2462 = vmul.f32 %v2458, %v2460
    %s2463 = sld [smem:[#allocation7 + $0x1]]
    %v2464 = vstv %s2463
    %v2465 = vadd.f32 %v2461, %v2464
    %v2466 = vadd.f32 %v2462, %v2464
    %2467 = vst [vmem:[#allocation9 + $0x10] sm:$0xff] %v2465
    %2468 = vst [vmem:[#allocation9 + $0x18] sm:$0xff] %v2466
    %v2469 = vld [vmem:[%s2 + $0x50] sm:$0xf]
    %v2470 = vld [vmem:[%s2 + $0x54] sm:$0xf]
    %v2471 = vld [vmem:[%s2 + $0x58] sm:$0xf]
    %v2472 = vld [vmem:[%s2 + $0x5c] sm:$0xf]
    %v2473 = vld [vmem:[%s2 + $0x60] sm:$0xf]
    %v2474 = vld [vmem:[%s2 + $0x64] sm:$0xf]
    %v2475 = vld [vmem:[%s2 + $0x68] sm:$0xf]
    %v2476 = vld [vmem:[%s2 + $0x6c] sm:$0xf]
    %v2477 = vld [vmem:[%s2 + $0x70] sm:$0xf]
    %v2478 = vld [vmem:[%s2 + $0x74] sm:$0xf]
    %2479 = vrot.lane.b32.xlu0 %v1704, 96
    %v2480 = vpop.permute.xlu0 %2479
    %2481 = vrot.lane.b32.xlu0 %v1706, 96
    %v2482 = vpop.permute.xlu0 %2481
    %2483 = vrot.lane.b32.xlu0 %v1708, 96
    %v2484 = vpop.permute.xlu0 %2483
    %2485 = vrot.lane.b32.xlu0 %v1710, 96
    %v2486 = vpop.permute.xlu0 %2485
    %2487 = vrot.lane.b32.xlu0 %v1712, 96
    %v2488 = vpop.permute.xlu0 %2487
    %2489 = vrot.lane.b32.xlu0 %v1714, 96
    %v2490 = vpop.permute.xlu0 %2489
    %2491 = vrot.lane.b32.xlu0 %v1716, 96
    %v2492 = vpop.permute.xlu0 %2491
    %2493 = vrot.lane.b32.xlu0 %v1718, 96
    %v2494 = vpop.permute.xlu0 %2493
    %v2505 = vunpack.c.l.b16 %v2469
    %v2506 = vunpack.c.l.b16 %v2470
    %v2507 = vunpack.c.l.b16 %v2471
    %v2508 = vunpack.c.l.b16 %v2472
    %v2509 = vunpack.c.l.b16 %v2473
    %v2510 = vunpack.c.l.b16 %v2474
    %v2511 = vunpack.c.l.b16 %v2475
    %v2512 = vunpack.c.l.b16 %v2476
    %v2513 = vunpack.c.l.b16 %v2477
    %v2514 = vunpack.c.l.b16 %v2478
    %v2515 = vpack.c.b16 %v2506, %v2505
    %v2516 = vpack.c.b16 %v2508, %v2507
    %v2517 = vpack.c.b16 %v2510, %v2509
    %v2518 = vpack.c.b16 %v2512, %v2511
    %v2519 = vpack.c.b16 %v2514, %v2513
    %v2526 = vsel %vm1274, %v2480, 0
    %v2529 = vsel %vm1274, %v2482, 0
    %v2532 = vsel %vm1274, %v2484, 0
    %v2535 = vsel %vm1274, %v2486, 0
    %v2538 = vsel %vm1274, %v2488, 0
    %v2541 = vsel %vm1274, %v2490, 0
    %v2544 = vsel %vm1274, %v2492, 0
    %v2547 = vsel %vm1274, %v2494, 0
    %2549 = vmatprep.subr.bf16.mxu0 0
    %2550 = vmatpush1.bf16.msra.mxu0 %v2515
    %2551 = vmatprep.subr.bf16.mxu0 0
    %2552 = vmatpush1.bf16.msra.mxu0 %v2516
    %2553 = vmatprep.subr.bf16.mxu0 0
    %2554 = vmatpush1.bf16.msra.mxu0 %v2517
    %2555 = vmatprep.subr.bf16.mxu0 0
    %2556 = vmatpush1.bf16.msra.mxu0 %v2518
    %2557 = vmatprep.subr.bf16.mxu0 0
    %2558 = vmatpush1.bf16.msra.mxu0 %v2519
    %2559 = vmatprep.subr.bf16.mxu0 0
    %2560 = vmatpush1.bf16.msra.mxu0 0
    %2561 = vmatprep.subr.bf16.mxu0 0
    %2562 = vmatpush1.bf16.msra.mxu0 0
    %2563 = vmatprep.subr.bf16.mxu0 0
    %2564 = vmatpush1.bf16.msra.mxu0 0
    %2565 = vmatprep.subr.bf16.mxu0 0
    %2566 = vmatpush1.bf16.msra.mxu0 0
    %2567 = vmatprep.subr.bf16.mxu0 0
    %2568 = vmatpush1.bf16.msra.mxu0 0
    %2569 = vmatprep.subr.bf16.mxu0 0
    %2570 = vmatpush1.bf16.msra.mxu0 0
    %2571 = vmatprep.subr.bf16.mxu0 0
    %2572 = vmatpush1.bf16.msra.mxu0 0
    %2573 = vmatprep.subr.bf16.mxu0 0
    %2574 = vmatpush1.bf16.msra.mxu0 0
    %2575 = vmatprep.subr.bf16.mxu0 0
    %2576 = vmatpush1.bf16.msra.mxu0 0
    %2577 = vmatprep.subr.bf16.mxu0 0
    %2578 = vmatpush1.bf16.msra.mxu0 0
    %2579 = vmatprep.subr.bf16.mxu0 0
    %2580 = vmatpush1.bf16.msra.mxu0 0
    %2581 = vmatprep.mubr.bf16.mxu0 0
    %2582 = vmatmul.mubr.bf16.gmra.mrb[0].mxu0 %v2526
    %v2583 = vpop.f32.mrb[0].mxu0
    %v2584 = vadd.f32 0.0, %v2583
    %v2585 = vpop.f32.mrb[0].mxu0
    %v2586 = vpop.f32.mrb[0].mxu0
    %v2587 = vadd.f32 0.0, %v2586
    %v2588 = vpop.f32.mrb[0].mxu0
    %2589 = vmatprep.mubr.bf16.mxu0 0
    %2590 = vmatmul.mubr.bf16.gmra.mrb[0].mxu0 %v2529
    %v2591 = vpop.f32.mrb[0].mxu0
    %v2592 = vadd.f32 0.0, %v2591
    %v2593 = vpop.f32.mrb[0].mxu0
    %v2594 = vpop.f32.mrb[0].mxu0
    %v2595 = vadd.f32 0.0, %v2594
    %v2596 = vpop.f32.mrb[0].mxu0
    %2597 = vmatprep.mubr.bf16.mxu0 0
    %2598 = vmatmul.mubr.bf16.gmra.mrb[0].mxu0 %v2532
    %v2599 = vpop.f32.mrb[0].mxu0
    %v2600 = vadd.f32 0.0, %v2599
    %v2601 = vpop.f32.mrb[0].mxu0
    %v2602 = vpop.f32.mrb[0].mxu0
    %v2603 = vadd.f32 0.0, %v2602
    %v2604 = vpop.f32.mrb[0].mxu0
    %2605 = vmatprep.mubr.bf16.mxu0 0
    %2606 = vmatmul.mubr.bf16.gmra.mrb[0].mxu0 %v2535
    %v2607 = vpop.f32.mrb[0].mxu0
    %v2608 = vadd.f32 0.0, %v2607
    %v2609 = vpop.f32.mrb[0].mxu0
    %v2610 = vpop.f32.mrb[0].mxu0
    %v2611 = vadd.f32 0.0, %v2610
    %v2612 = vpop.f32.mrb[0].mxu0
    %2613 = vmatprep.mubr.bf16.mxu0 0
    %2614 = vmatmul.mubr.bf16.gmra.mrb[0].mxu0 %v2538
    %v2615 = vpop.f32.mrb[0].mxu0
    %v2616 = vadd.f32 0.0, %v2615
    %v2617 = vpop.f32.mrb[0].mxu0
    %v2618 = vpop.f32.mrb[0].mxu0
    %v2619 = vadd.f32 0.0, %v2618
    %v2620 = vpop.f32.mrb[0].mxu0
    %2621 = vmatprep.mubr.bf16.mxu0 0
    %2622 = vmatmul.mubr.bf16.gmra.mrb[0].mxu0 %v2541
    %v2623 = vpop.f32.mrb[0].mxu0
    %v2624 = vadd.f32 0.0, %v2623
    %v2625 = vpop.f32.mrb[0].mxu0
    %v2626 = vpop.f32.mrb[0].mxu0
    %v2627 = vadd.f32 0.0, %v2626
    %v2628 = vpop.f32.mrb[0].mxu0
    %2629 = vmatprep.mubr.bf16.mxu0 0
    %2630 = vmatmul.mubr.bf16.gmra.mrb[0].mxu0 %v2544
    %v2631 = vpop.f32.mrb[0].mxu0
    %v2632 = vadd.f32 0.0, %v2631
    %v2633 = vpop.f32.mrb[0].mxu0
    %v2634 = vpop.f32.mrb[0].mxu0
    %v2635 = vadd.f32 0.0, %v2634
    %v2636 = vpop.f32.mrb[0].mxu0
    %2637 = vmatprep.mubr.bf16.mxu0 0
    %2638 = vmatmul.mubr.bf16.gmra.mrb[0].mxu0 %v2547
    %v2639 = vpop.f32.mrb[0].mxu0
    %v2640 = vadd.f32 0.0, %v2639
    %v2641 = vpop.f32.mrb[0].mxu0
    %v2642 = vpop.f32.mrb[0].mxu0
    %v2643 = vpop.f32.mrb[0].mxu0
    %2644 = vdwg.mxu0
    %2646 = vrot.lane.b32.xlu0 %v2587, 16
    %v2647 = vpop.permute.xlu0 %2646
    %2650 = vrot.lane.b32.xlu0 %v2592, 32
    %v2651 = vpop.permute.xlu0 %2650
    %2654 = vrot.lane.b32.xlu0 %v2595, 48
    %v2655 = vpop.permute.xlu0 %2654
    %2658 = vrot.lane.b32.xlu0 %v2600, 64
    %v2659 = vpop.permute.xlu0 %2658
    %2662 = vrot.lane.b32.xlu0 %v2603, 80
    %v2663 = vpop.permute.xlu0 %2662
    %2666 = vrot.lane.b32.xlu0 %v2608, 96
    %v2667 = vpop.permute.xlu0 %2666
    %2670 = vrot.lane.b32.xlu0 %v2611, 112
    %v2671 = vpop.permute.xlu0 %2670
    %2674 = vrot.lane.b32.xlu0 %v2619, 16
    %v2675 = vpop.permute.xlu0 %2674
    %2678 = vrot.lane.b32.xlu0 %v2624, 32
    %v2679 = vpop.permute.xlu0 %2678
    %2682 = vrot.lane.b32.xlu0 %v2627, 48
    %v2683 = vpop.permute.xlu0 %2682
    %2686 = vrot.lane.b32.xlu0 %v2632, 64
    %v2687 = vpop.permute.xlu0 %2686
    %2690 = vrot.lane.b32.xlu0 %v2635, 80
    %v2691 = vpop.permute.xlu0 %2690
    %2694 = vrot.lane.b32.xlu0 %v2640, 96
    %v2695 = vpop.permute.xlu0 %2694
    %v2697 = vsel %vm1223, %v2584, %v2647
    %v2698 = vsel %vm1236, %v2697, %v2651
    %v2699 = vsel %vm596, %v2698, %v2655
    %v2700 = vsel %vm1261, %v2699, %v2659
    %v2701 = vsel %vm1274, %v2700, %v2663
    %v2702 = vsel %vm1287, %v2701, %v2667
    %v2703 = vsel %vm1297, %v2702, %v2671
    %v2704 = vsel %vm1223, %v2616, %v2675
    %v2705 = vsel %vm1236, %v2704, %v2679
    %v2706 = vsel %vm596, %v2705, %v2683
    %v2707 = vsel %vm1261, %v2706, %v2687
    %v2708 = vsel %vm1274, %v2707, %v2691
    %v2709 = vsel %vm1287, %v2708, %v2695
    %2711 = vrot.lane.b32.xlu0 %v2584, 112
    %v2712 = vpop.permute.xlu0 %2711
    %2714 = vrot.lane.b32.xlu0 %v2592, 16
    %v2715 = vpop.permute.xlu0 %2714
    %2717 = vrot.lane.b32.xlu0 %v2595, 32
    %v2718 = vpop.permute.xlu0 %2717
    %2720 = vrot.lane.b32.xlu0 %v2600, 48
    %v2721 = vpop.permute.xlu0 %2720
    %2723 = vrot.lane.b32.xlu0 %v2603, 64
    %v2724 = vpop.permute.xlu0 %2723
    %2726 = vrot.lane.b32.xlu0 %v2608, 80
    %v2727 = vpop.permute.xlu0 %2726
    %2729 = vrot.lane.b32.xlu0 %v2611, 96
    %v2730 = vpop.permute.xlu0 %2729
    %2733 = vrot.lane.b32.xlu0 %v2616, 112
    %v2734 = vpop.permute.xlu0 %2733
    %2736 = vrot.lane.b32.xlu0 %v2624, 16
    %v2737 = vpop.permute.xlu0 %2736
    %2739 = vrot.lane.b32.xlu0 %v2627, 32
    %v2740 = vpop.permute.xlu0 %2739
    %2742 = vrot.lane.b32.xlu0 %v2632, 48
    %v2743 = vpop.permute.xlu0 %2742
    %2745 = vrot.lane.b32.xlu0 %v2635, 64
    %v2746 = vpop.permute.xlu0 %2745
    %2748 = vrot.lane.b32.xlu0 %v2640, 80
    %v2749 = vpop.permute.xlu0 %2748
    %v2751 = vsel %vm1223, %v2712, %v2587
    %v2752 = vsel %vm1236, %v2751, %v2715
    %v2753 = vsel %vm596, %v2752, %v2718
    %v2754 = vsel %vm1261, %v2753, %v2721
    %v2755 = vsel %vm1274, %v2754, %v2724
    %v2756 = vsel %vm1287, %v2755, %v2727
    %v2757 = vsel %vm1297, %v2756, %v2730
    %v2758 = vsel %vm1223, %v2734, %v2619
    %v2759 = vsel %vm1236, %v2758, %v2737
    %v2760 = vsel %vm596, %v2759, %v2740
    %v2761 = vsel %vm1261, %v2760, %v2743
    %v2762 = vsel %vm1274, %v2761, %v2746
    %v2763 = vsel %vm1287, %v2762, %v2749
    %v2764 = vsel %vm1297, %v2709, 0.0
    %2767 = vrot.lane.b32.xlu0 %v2757, 16
    %v2768 = vpop.permute.xlu0 %2767
    %2769 = vrot.lane.b32.xlu0 %v2763, 16
    %v2770 = vpop.permute.xlu0 %2769
    %v2771 = vsel %vm1223, %v2768, %v2770
    %v2774 = vsel %vm1223, 0.0, %v2768
    %v2775 = vadd.f32 %v2703, %v2774
    %v2776 = vadd.f32 %v2764, %v2771
    %v2777 = vmul.f32 %v2775, %v1723
    %v2778 = vmul.f32 %v2776, %v1723
    %v2779 = vadd.f32 %v2777, %v2778
    %2780 = vadd.xlane.f32.xlu0 %v2779
    %v2781 = vpop.xlane.xlu0 %2780
    %v2782 = vrot.slane %v2781, 4
    %v2783 = vadd.f32 %v2781, %v2782
    %v2784 = vrot.slane %v2783, 2
    %v2785 = vadd.f32 %v2783, %v2784
    %v2786 = vrot.slane %v2785, 1
    %v2787 = vadd.f32 %v2785, %v2786
    %s2788 = vtos %v2787
    %v2789 = vrcp.pop 512.0
    %s2790 = vtos %v2789
    %s2791 = smul.f32 %s2788, %s2790
    %v2792 = vstv %s2791
    %v2793 = vsub.f32 %v2775, %v2792
    %v2794 = vsub.f32 %v2776, %v2792
    %v2795 = vmul.f32 %v2793, %v1723
    %v2796 = vmul.f32 %v2794, %v1723
    %v2797 = vmul.f32 %v2795, %v2795
    %v2798 = vmul.f32 %v2796, %v2796
    %v2799 = vadd.f32 %v2797, %v2798
    %2800 = vadd.xlane.f32.xlu0 %v2799
    %v2801 = vpop.xlane.xlu0 %2800
    %v2802 = vrot.slane %v2801, 4
    %v2803 = vadd.f32 %v2801, %v2802
    %v2804 = vrot.slane %v2803, 2
    %v2805 = vadd.f32 %v2803, %v2804
    %v2806 = vrot.slane %v2805, 1
    %v2807 = vadd.f32 %v2805, %v2806
    %s2808 = vtos %v2807
    %v2809 = vrcp.pop 512.0
    %s2810 = vtos %v2809
    %s2811 = smul.f32 %s2808, %s2810
    %s2812 = sadd.f32 %s2811, 1e-05
    %v2813 = vstv %s2812
    %v2814 = vrsqrt.pop %v2813
    %s2815 = vtos %v2814
    %v2816 = vstv %s2815
    %v2817 = vmul.f32 %v2793, %v2816
    %v2818 = vmul.f32 %v2794, %v2816
    %s2819 = sld [smem:[#allocation6 + $0x2]]
    %v2820 = vstv %s2819
    %v2821 = vmul.f32 %v2817, %v2820
    %v2822 = vmul.f32 %v2818, %v2820
    %s2823 = sld [smem:[#allocation7 + $0x2]]
    %v2824 = vstv %s2823
    %v2825 = vadd.f32 %v2821, %v2824
    %v2826 = vadd.f32 %v2822, %v2824
    %2827 = vst [vmem:[#allocation9 + $0x20] sm:$0xff] %v2825
    %2828 = vst [vmem:[#allocation9 + $0x28] sm:$0xff] %v2826
    // Predicated region
    $region42: #{tpu_custom_call.1} parent=1 // pred_check
      _
    $region43: #{tpu_custom_call.1} parent=1 // pred_check_branch
      %2830 = sbr.rel (0) target = $region45
    $region44: #{tpu_custom_call.1} parent=1 // pred_region
      %s2832 = ssub.s32 768, 768
      %2833 = vsyncadd [#allocation4], %s2832
      %s2835 = sshll.u32 [#allocation9], 4
      %s2836 = int_to_ptr.vmem [resolvable:$true] %s2835
      %2838 = dma.vmem_to_hbm [thread:$0]  %s2836, 768, %s7, [#allocation4]
    $region45: #{tpu_custom_call.1} parent=1 // pred_fallthru
      _
    // Predicated region
    $region46: #{tpu_custom_call.1} parent=1 // pred_check
      _
    $region47: #{tpu_custom_call.1} parent=1 // pred_check_branch
      %2840 = sbr.rel (0) target = $region49
    $region48: #{tpu_custom_call.1} parent=1 // pred_region
      %2841 = dma.done [#allocation4], 768
    $region49: #{tpu_custom_call.1} parent=1 // pred_fallthru
      _
    %2842 = vsyncpa [#allocation3], 1
    %2843 = vsyncpa [#allocation4], 1
    %2844 = vsyncpa [#allocation5], 1
    %2845 = vsyncpa [#allocation8], 1

</llo_original>
